<compile_context>
chip_gen: v6e
topology: v6e:2x2x1
jax: 0.10.0
libtpu: 0.0.40
codegen_flags: <defaults>
</compile_context>

<pallas_src>
import functools

import jax
import jax.numpy as jnp
from jax.experimental import pallas as pl
from jax.experimental.pallas import tpu as pltpu


def _round_up(x, m):
    return ((x + m - 1) // m) * m


_TINY_WIDTH = 32  # below this, skip lane padding of the output feature axis


def _vmem_budget_and_limit():
    """Returns (tile-selection budget, vmem_limit_bytes).

    Clamped to a per-TensorCore-safe value: v7x has only 64 MiB per TC and the
    reported capacity may be per-chip, so never trust more than 64 MiB, and
    leave compiler headroom below the physical per-TC size.
    """
    try:
        cap = int(pltpu.get_tpu_info().vmem_capacity_bytes)
    except Exception:  # conservative lower bound across v5e / v6e / v7x
        cap = 64 * 1024 * 1024
    cap = min(cap, 64 * 1024 * 1024)
    limit = min(cap, 56 * 1024 * 1024)
    budget = limit * 3 // 4
    return budget, limit


def _select_tile_m(n, in_features, out_padded, x_itemsize, out_itemsize,
                   vmem_budget, max_tile_m=1024):
    """Largest row tile whose VMEM working set fits the budget, with >= 4 grid
    steps (>= 2 per v7x TensorCore) whenever N allows it.

    max_tile_m defaults to 1024: measured HBM roofline saturates by ~512-1024
    rows (incl. v5e); larger tiles only add VMEM pressure.
    """
    n_rounded = _round_up(n, 8)
    # Grid-invariant W / b are single-buffered (pl.Buffered(1)) -> count once.
    resident = in_features * out_padded * x_itemsize + out_padded * 4
    # Per-row pipelined traffic: double-buffered x tile, double-buffered out
    # tile, plus the f32 activation intermediates (z / scale / sin argument).
    per_row = (2 * in_features * x_itemsize
               + 2 * out_padded * out_itemsize
               + 3 * out_padded * 4)
    tile_m = max(_round_up(min(max_tile_m, n_rounded), 8), 8)
    while tile_m > 8 and tile_m * per_row + resident > vmem_budget:
        tile_m = max(_round_up(tile_m // 2, 8), 8)
    # v7x megacore: >= 2 grid steps per TensorCore (>= 4 total) so both cores
    # take work AND the x-in / out-back DMAs overlap with compute.
    min_steps = 4
    while tile_m > 8 and pl.cdiv(n, tile_m) < min_steps and n > 8 * min_steps:
        tile_m = max(_round_up(tile_m // 2, 8), 8)
    return tile_m


def _finer_kernel(x_ref, w_ref, b_ref, o_ref, *, omega_0):
    # Full K (in_features) and the (possibly lane-padded) out_features live in
    # one block; only the point dimension N is tiled by the grid.
    # MXU matmul with f32 accumulation (inputs may be f32 or bf16).
    z = jnp.dot(x_ref[...], w_ref[...], preferred_element_type=jnp.float32)
    z = z + b_ref[...]  # b_ref is (1, out_padded) f32 -> broadcasts over rows
    # FINER activation, strictly in f32 (v5e VPU/EUP have no bf16 path and the
    # O(1e3)-radian sin argument needs f32 precision):
    #   sin(omega_0 * (|z| + 1) * z)
    o_ref[...] = jnp.sin(omega_0 * (jnp.abs(z) + 1.0) * z).astype(o_ref.dtype)
    # TODO(synk): nn.Dropout with dropout_prc > 0.0 (training mode) not
    # implemented; the module default is Identity, which is what we reproduce.
    # TODO(synk): for a full FINER MLP, fuse consecutive layers into one
    # pallas_call (activations kept in VMEM scratch) so intermediates never
    # round-trip HBM -- the dominant end-to-end lever for INR networks.


def finer_layer(x, w, b, *, omega_0=30.0, tile_m=None, out_dtype=None):
    """FINER layer forward.

    x: [N, in_features], w: [in_features, out_features], b: [out_features].

    Dtypes: all in-kernel math (MXU accumulation + activation) is f32. The
    wrapper never casts x (a wrapper-side cast would add a full HBM
    read+write); pass bf16 x only if it already lives in bf16 upstream, and
    note that with O(1e3)-radian sin phases bf16 inputs are a semantic change
    vs. the f32 PyTorch layer, not just a precision knob. out_dtype defaults
    to x.dtype; pass jnp.bfloat16 when the consumer tolerates it (sin outputs
    are in [-1, 1]) to halve output HBM traffic.
    """
    n, in_features = x.shape
    k_in, out_features = w.shape
    assert k_in == in_features, "weight shape must be [in_features, out_features]"

    out_dtype = jnp.dtype(out_dtype) if out_dtype is not None else x.dtype
    if w.dtype != x.dtype:
        w = w.astype(x.dtype)  # W is small & grid-invariant; x is never cast.

    # Column-padding policy (see header): multiples of 128 untouched, mid
    # widths padded lane-dense, tiny heads left at their true width.
    if out_features % 128 == 0 or out_features < _TINY_WIDTH:
        out_padded = out_features
    else:
        out_padded = _round_up(out_features, 128)
    if out_padded != out_features:
        w = jnp.pad(w, ((0, 0), (0, out_padded - out_features)))
        b = jnp.pad(b, ((0, out_padded - out_features),))
    b2 = b.astype(jnp.float32).reshape(1, out_padded)  # bias stays f32

    vmem_budget, vmem_limit = _vmem_budget_and_limit()
    if tile_m is None:
        tile_m = _select_tile_m(
            n, in_features, out_padded,
            jnp.dtype(x.dtype).itemsize, out_dtype.itemsize, vmem_budget)

    kernel = functools.partial(_finer_kernel, omega_0=float(omega_0))
    grid = (pl.cdiv(n, tile_m),)  # ragged N: partial last block is masked

    def _call(single_buffer_weights):
        invariant_kwargs = (
            dict(pipeline_mode=pl.Buffered(1)) if single_buffer_weights else {})
        return pl.pallas_call(
            kernel,
            out_shape=jax.ShapeDtypeStruct((n, out_padded), out_dtype),
            grid_spec=pltpu.PrefetchScalarGridSpec(
                num_scalar_prefetch=0,
                grid=grid,
                in_specs=[
                    pl.BlockSpec((tile_m, in_features), lambda i: (i, 0)),
                    # W and b are grid-invariant (constant index_map): fetched
                    # once and, when supported, single-buffered in VMEM.
                    pl.BlockSpec((in_features, out_padded), lambda i: (0, 0),
                                 **invariant_kwargs),
                    pl.BlockSpec((1, out_padded), lambda i: (0, 0),
                                 **invariant_kwargs),
                ],
                out_specs=pl.BlockSpec((tile_m, out_padded), lambda i: (i, 0)),
            ),
            compiler_params=pltpu.CompilerParams(
                dimension_semantics=("parallel",),
                vmem_limit_bytes=int(vmem_limit),
            ),
        )(x, w, b2)

    if hasattr(pl, "Buffered"):
        try:
            out = _call(True)
        except Exception:
            # pipeline_mode / Buffered(1) rejected by this JAX version: fall
            # back to the default (double-buffered) pipeline.
            out = _call(False)
    else:
        out = _call(False)

    if out_padded != out_features:
        out = out[:, :out_features]
    return out


def finer_init(key, in_features, out_features, *, is_first=False,
               omega_0=30.0, first_k=10.0, hidden_k=10.0):
    """Deterministic FINER-style init (shapes match nn.Linear(in, out))."""
    kw, kb = jax.random.split(key)
    if is_first:
        w_bound = 1.0 / in_features
        b_bound = float(first_k)
    else:
        w_bound = float(jnp.sqrt(6.0 / in_features) / omega_0)
        b_bound = float(hidden_k)
    # PyTorch weight is [out, in]; we store transposed [in, out] for x @ W.
    w = jax.random.uniform(kw, (in_features, out_features),
                           minval=-w_bound, maxval=w_bound, dtype=jnp.float32)
    b = jax.random.uniform(kb, (out_features,),
                           minval=-b_bound, maxval=b_bound, dtype=jnp.float32)
    return w, b


def finer_layer_ref(x, w, b, *, omega_0=30.0):
    z = x @ w + b
    return jnp.sin(omega_0 * (jnp.abs(z) + 1.0) * z)


if __name__ == "__main__":
    key = jax.random.PRNGKey(0)
    k_x, k1, k2, k3 = jax.random.split(key, 4)

    # Small INR-like stack: coordinates lifted to 32 features, two hidden
    # layers, tiny output head. N = 300 is deliberately not a multiple of the
    # tile so the cdiv-grid / partial-block path is exercised.
    N = 300
    in_features = 32
    h1, h2, out_head = 64, 128, 3

    x = jax.random.uniform(k_x, (N, in_features), minval=-1.0, maxval=1.0,
                           dtype=jnp.float32)

    # Layer 1: first layer, 64-wide (lane-pad 64 -> 128 path), ragged N.
    w1, b1 = finer_init(k1, in_features, h1, is_first=True, omega_0=30.0)
    out1 = jax.block_until_ready(finer_layer(x, w1, b1, omega_0=30.0))
    ref1 = finer_layer_ref(x, w1, b1, omega_0=30.0)
    assert out1.shape == (N, h1)
    assert jnp.allclose(out1, ref1, atol=2e-3, rtol=2e-3), "mismatch (layer 1)"

    # Layer 2: hidden layer, 128-wide (no-pad lane-dense path), divisible N.
    x2 = ref1[:256]
    w2, b2 = finer_init(k2, h1, h2, is_first=False, omega_0=30.0)
    out2 = jax.block_until_ready(finer_layer(x2, w2, b2, omega_0=30.0))
    ref2 = finer_layer_ref(x2, w2, b2, omega_0=30.0)
    assert out2.shape == (256, h2)
    assert jnp.allclose(out2, ref2, atol=2e-3, rtol=2e-3), "mismatch (layer 2)"

    # Layer 3: tiny 3-wide head (unpadded, masked-store path).
    w3, b3 = finer_init(k3, h2, out_head, is_first=False, omega_0=30.0)
    out3 = jax.block_until_ready(finer_layer(ref2, w3, b3, omega_0=30.0))
    ref3 = finer_layer_ref(ref2, w3, b3, omega_0=30.0)
    assert out3.shape == (256, out_head)
    assert jnp.allclose(out3, ref3, atol=2e-3, rtol=2e-3), "mismatch (layer 3)"

    print("KERNEL_OK")
</pallas_src>

<mosaic_0001>
module attributes {stable_mosaic.version = 11 : i64} {
  func.func @_finer_kernel(%arg0: i32, %arg1: memref<80x32xf32, #tpu.memory_space<vmem>>, %arg2: memref<32x128xf32, #tpu.memory_space<vmem>>, %arg3: memref<1x128xf32, #tpu.memory_space<vmem>>, %arg4: memref<80x128xf32, #tpu.memory_space<vmem>>) attributes {dimension_semantics = [#tpu.dimension_semantics<parallel>], iteration_bounds = array<i64: 4>, scalar_prefetch = 0 : i64, scratch_operands = 0 : i64, tpu.core_type = #tpu.core_type<tc>, window_params = [{transform_indices = @transform_0, window_bounds = array<i64: 80, 32>}, {pipeline_mode = #tpu.pipeline_mode<synchronous>, transform_indices = @transform_1, window_bounds = array<i64: 32, 128>}, {pipeline_mode = #tpu.pipeline_mode<synchronous>, transform_indices = @transform_2, window_bounds = array<i64: 1, 128>}, {transform_indices = @transform_3, window_bounds = array<i64: 80, 128>}]} {
    %c0 = arith.constant 0 : index
    %c0_0 = arith.constant 0 : index
    %0 = vector.load %arg1[%c0, %c0_0] : memref<80x32xf32, #tpu.memory_space<vmem>>, vector<80x32xf32>
    %c0_1 = arith.constant 0 : index
    %c0_2 = arith.constant 0 : index
    %1 = vector.load %arg2[%c0_1, %c0_2] : memref<32x128xf32, #tpu.memory_space<vmem>>, vector<32x128xf32>
    %cst = arith.constant dense<0.000000e+00> : vector<80x128xf32>
    %2 = tpu.matmul %0, %1, %cst {dimension_numbers = #tpu.dot_dimension_numbers<[1], [0], [0], [1], [0, 0, 1, 1], [], []>} : vector<80x32xf32>, vector<32x128xf32>, vector<80x128xf32> -> vector<80x128xf32>
    %c0_3 = arith.constant 0 : index
    %c0_4 = arith.constant 0 : index
    %3 = vector.load %arg3[%c0_3, %c0_4] : memref<1x128xf32, #tpu.memory_space<vmem>>, vector<1x128xf32>
    %4 = vector.broadcast %3 : vector<1x128xf32> to vector<80x128xf32>
    %5 = arith.addf %2, %4 : vector<80x128xf32>
    %6 = math.absf %5 : vector<80x128xf32>
    %cst_5 = arith.constant 1.000000e+00 : f32
    %7 = vector.broadcast %cst_5 : f32 to vector<80x128xf32>
    %8 = arith.addf %6, %7 : vector<80x128xf32>
    %cst_6 = arith.constant 3.000000e+01 : f32
    %9 = vector.broadcast %cst_6 : f32 to vector<80x128xf32>
    %10 = arith.mulf %9, %8 : vector<80x128xf32>
    %11 = arith.mulf %10, %5 : vector<80x128xf32>
    %12 = math.sin %11 : vector<80x128xf32>
    %c0_7 = arith.constant 0 : index
    %c0_8 = arith.constant 0 : index
    %13 = vector.load %arg4[%c0_7, %c0_8] : memref<80x128xf32, #tpu.memory_space<vmem>>, vector<80x128xf32>
    tpu.vector_store %arg4[%c0_7, %c0_8], %12 {strides = array<i32>} : memref<80x128xf32, #tpu.memory_space<vmem>>, vector<80x128xf32>,
    return
  }
  func.func @transform_0(%arg0: i32) -> (i32, i32) {
    %c0_i32 = arith.constant 0 : i32
    %c0_i32_0 = arith.constant 0 : i32
    return %arg0, %c0_i32 : i32, i32
  }
  func.func @transform_1(%arg0: i32) -> (i32, i32) {
    %c0_i32 = arith.constant 0 : i32
    %c0_i32_0 = arith.constant 0 : i32
    %c0_i32_1 = arith.constant 0 : i32
    return %c0_i32, %c0_i32_0 : i32, i32
  }
  func.func @transform_2(%arg0: i32) -> (i32, i32) {
    %c0_i32 = arith.constant 0 : i32
    %c0_i32_0 = arith.constant 0 : i32
    %c0_i32_1 = arith.constant 0 : i32
    return %c0_i32, %c0_i32_0 : i32, i32
  }
  func.func @transform_3(%arg0: i32) -> (i32, i32) {
    %c0_i32 = arith.constant 0 : i32
    %c0_i32_0 = arith.constant 0 : i32
    return %arg0, %c0_i32 : i32, i32
  }
}

module attributes {stable_mosaic.version = 11 : i64} {
  func.func @_finer_kernel(%arg0: i32, %arg1: memref<80x32xf32, #tpu.memory_space<vmem>>, %arg2: memref<32x128xf32, #tpu.memory_space<vmem>>, %arg3: memref<1x128xf32, #tpu.memory_space<vmem>>, %arg4: memref<80x128xf32, #tpu.memory_space<vmem>>) attributes {dimension_semantics = [#tpu.dimension_semantics<parallel>], iteration_bounds = array<i64: 4>, scalar_prefetch = 0 : i64, scratch_operands = 0 : i64, tpu.core_type = #tpu.core_type<tc>, window_params = [{transform_indices = @transform_0, window_bounds = array<i64: 80, 32>}, {pipeline_mode = #tpu.pipeline_mode<synchronous>, transform_indices = @transform_1, window_bounds = array<i64: 32, 128>}, {pipeline_mode = #tpu.pipeline_mode<synchronous>, transform_indices = @transform_2, window_bounds = array<i64: 1, 128>}, {transform_indices = @transform_3, window_bounds = array<i64: 80, 128>}]} {
    %c0 = arith.constant 0 : index
    %c0_0 = arith.constant 0 : index
    %0 = vector.load %arg1[%c0, %c0_0] : memref<80x32xf32, #tpu.memory_space<vmem>>, vector<80x32xf32>
    %c0_1 = arith.constant 0 : index
    %c0_2 = arith.constant 0 : index
    %1 = vector.load %arg2[%c0_1, %c0_2] : memref<32x128xf32, #tpu.memory_space<vmem>>, vector<32x128xf32>
    %cst = arith.constant dense<0.000000e+00> : vector<80x128xf32>
    %2 = tpu.matmul %0, %1, %cst {dimension_numbers = #tpu.dot_dimension_numbers<[1], [0], [0], [1], [0, 0, 1, 1], [], []>} : vector<80x32xf32>, vector<32x128xf32>, vector<80x128xf32> -> vector<80x128xf32>
    %c0_3 = arith.constant 0 : index
    %c0_4 = arith.constant 0 : index
    %3 = vector.load %arg3[%c0_3, %c0_4] : memref<1x128xf32, #tpu.memory_space<vmem>>, vector<1x128xf32>
    %4 = vector.broadcast %3 : vector<1x128xf32> to vector<80x128xf32>
    %5 = arith.addf %2, %4 : vector<80x128xf32>
    %6 = math.absf %5 : vector<80x128xf32>
    %cst_5 = arith.constant 1.000000e+00 : f32
    %7 = vector.broadcast %cst_5 : f32 to vector<80x128xf32>
    %8 = arith.addf %6, %7 : vector<80x128xf32>
    %cst_6 = arith.constant 3.000000e+01 : f32
    %9 = vector.broadcast %cst_6 : f32 to vector<80x128xf32>
    %10 = arith.mulf %9, %8 : vector<80x128xf32>
    %11 = arith.mulf %10, %5 : vector<80x128xf32>
    %12 = math.sin %11 : vector<80x128xf32>
    %c0_7 = arith.constant 0 : index
    %c0_8 = arith.constant 0 : index
    %13 = vector.load %arg4[%c0_7, %c0_8] : memref<80x128xf32, #tpu.memory_space<vmem>>, vector<80x128xf32>
    tpu.vector_store %arg4[%c0_7, %c0_8], %12 {strides = array<i32>} : memref<80x128xf32, #tpu.memory_space<vmem>>, vector<80x128xf32>,
    return
  }
  func.func @transform_0(%arg0: i32) -> (i32, i32) {
    %c0_i32 = arith.constant 0 : i32
    %c0_i32_0 = arith.constant 0 : i32
    return %arg0, %c0_i32 : i32, i32
  }
  func.func @transform_1(%arg0: i32) -> (i32, i32) {
    %c0_i32 = arith.constant 0 : i32
    %c0_i32_0 = arith.constant 0 : i32
    %c0_i32_1 = arith.constant 0 : i32
    return %c0_i32, %c0_i32_0 : i32, i32
  }
  func.func @transform_2(%arg0: i32) -> (i32, i32) {
    %c0_i32 = arith.constant 0 : i32
    %c0_i32_0 = arith.constant 0 : i32
    %c0_i32_1 = arith.constant 0 : i32
    return %c0_i32, %c0_i32_0 : i32, i32
  }
  func.func @transform_3(%arg0: i32) -> (i32, i32) {
    %c0_i32 = arith.constant 0 : i32
    %c0_i32_0 = arith.constant 0 : i32
    return %arg0, %c0_i32 : i32, i32
  }
}

</mosaic_0001>

<llo_original>
// kernel: tpu_custom_call.1
$region0: #{tpu_custom_call.1}
  #allocation0 [shape = 'u32[]', space=smem, size = 0x4, offset = 0x4, fixed_abs, tag = 'smem constant byte address 0x4 - core index']
  #allocation1 [shape = 'u32[144,128]{1,0:T(1,128)}', space=vmem, size = 0x12000, scoped, tag = 'internal scratch']
  %s0 = inlined_call_operand.vmem [shape: f32[300,32], index: 0, kind: input, shape index: {}]
  %s1 = inlined_call_operand.vmem [shape: f32[32,128], index: 1, kind: input, shape index: {}]
  %s2 = inlined_call_operand.vmem [shape: f32[1,128], index: 2, kind: input, shape index: {}]
  %s3 = inlined_call_operand.hbm [shape: f32[300,128], index: 3, kind: output, shape index: {}]
  %s4 = sld [smem:[#allocation0]]
  $region45: #{tpu_custom_call.1} parent=0
    _
  %s6 = ssub.s32 1, %s4
  %s7 = scalar_select 0, %s6, %s4
  $region1: #{tpu_custom_call.1} parent=0
    #allocation2 [shape = 'u8[81920]{0}', space=vmem, size = 0x14000, scoped, tag = 'output window, operand 0']
    #allocation3 [shape = 's32[2]{0}', space=sflag, size = 0x8, scoped, tag = 'scoped memory for tpu_custom_call.1']
    %8 = vsyncpa [#allocation3], 0
    %s9 = scalar_lea.sflag [#allocation3], 1
    %10 = vsyncpa %s9, 0
    loop: start=0, step=1, limit=6
    $region2: #{tpu_custom_call.1} parent=1 // loop_pre_header
      _
    $region3: #{tpu_custom_call.1} parent=1 // loop_header
      %s12 = sphi 0, %s16
      %p13 = scmp.ge.s32.totalorder %s12, 6
      %s22 = sphi 0, %s24
      %s25 = sphi 0, %s22
      %s26 = sphi 0, %s25
      %s42 = sphi 0, %s26
      %s46 = sphi 0, %s46
      %s48 = sphi 0, %s46
      %s49 = sphi 0, %s48
      %s63 = sphi 0, %s49
      %s67 = sphi 0, %s67
      %s69 = sphi 0, %s67
      %s70 = sphi 0, %s69
      %s84 = sphi 0, %s70
      %s90 = sphi 0, %s92
      %s93 = sphi 0, %s90
      %s94 = sphi 0, %s93
      %s110 = sphi 0, %s94
    $region4: #{tpu_custom_call.1} parent=1 // loop_header_branch
      %15 = sbr.rel (%p13) target = $region8
    $region5: #{tpu_custom_call.1} parent=1 // loop_body
      %s17 = ssub.s32 %s12, 1
      %s18 = ssub.s32 %s12, 2
      %s19 = sadd.s32 %s12, 1
      %s20 = ssub.s32 %s12, %s19
      %p21 = scmp.eq.s32.totalorder %s20, 0
      %s23 = sadd.s32 %s22, 1
      %s24 = scalar_select %p21, %s22, %s23
      %p27 = pneg %p21
      %p28 = scmp.eq.s32.totalorder %s12, 3
      %p29 = por %p27, %p28
      %p30 = scmp.ne.s32.totalorder %s22, %s25
      %p31 = scmp.eq.s32.totalorder %s12, 0
      %p32 = por %p30, %p31
      %p33 = scmp.ne.s32.totalorder %s22, %s25
      %p34 = scmp.eq.s32.totalorder %s17, 3
      %p35 = por %p33, %p34
      %p36 = scmp.ne.s32.totalorder %s25, %s26
      %p37 = scmp.eq.s32.totalorder %s17, 0
      %p38 = por %p36, %p37
      %p39 = scmp.ne.s32.totalorder %s25, %s26
      %p40 = scmp.eq.s32.totalorder %s18, 3
      %p41 = por %p39, %p40
      %p43 = scmp.ne.s32.totalorder %s26, %s42
      %p44 = scmp.eq.s32.totalorder %s18, 0
      %p45 = por %p43, %p44
      %s47 = sadd.s32 %s46, 1
      %p50 = scmp.eq.s32.totalorder %s12, 3
      %p51 = scmp.ne.s32.totalorder %s46, %s48
      %p52 = scmp.eq.s32.totalorder %s12, 0
      %p53 = por %p51, %p52
      %p54 = scmp.ne.s32.totalorder %s46, %s48
      %p55 = scmp.eq.s32.totalorder %s17, 3
      %p56 = por %p54, %p55
      %p57 = scmp.ne.s32.totalorder %s48, %s49
      %p58 = scmp.eq.s32.totalorder %s17, 0
      %p59 = por %p57, %p58
      %p60 = scmp.ne.s32.totalorder %s48, %s49
      %p61 = scmp.eq.s32.totalorder %s18, 3
      %p62 = por %p60, %p61
      %p64 = scmp.ne.s32.totalorder %s49, %s63
      %p65 = scmp.eq.s32.totalorder %s18, 0
      %p66 = por %p64, %p65
      %s68 = sadd.s32 %s67, 1
      %p71 = scmp.eq.s32.totalorder %s12, 3
      %p72 = scmp.ne.s32.totalorder %s67, %s69
      %p73 = scmp.eq.s32.totalorder %s12, 0
      %p74 = por %p72, %p73
      %p75 = scmp.ne.s32.totalorder %s67, %s69
      %p76 = scmp.eq.s32.totalorder %s17, 3
      %p77 = por %p75, %p76
      %p78 = scmp.ne.s32.totalorder %s69, %s70
      %p79 = scmp.eq.s32.totalorder %s17, 0
      %p80 = por %p78, %p79
      %p81 = scmp.ne.s32.totalorder %s69, %s70
      %p82 = scmp.eq.s32.totalorder %s18, 3
      %p83 = por %p81, %p82
      %p85 = scmp.ne.s32.totalorder %s70, %s84
      %p86 = scmp.eq.s32.totalorder %s18, 0
      %p87 = por %p85, %p86
      %s88 = ssub.s32 %s12, %s19
      %p89 = scmp.eq.s32.totalorder %s88, 0
      %s91 = sadd.s32 %s90, 1
      %s92 = scalar_select %p89, %s90, %s91
      %p95 = pneg %p89
      %p96 = scmp.eq.s32.totalorder %s12, 3
      %p97 = por %p95, %p96
      %p98 = scmp.ne.s32.totalorder %s90, %s93
      %p99 = scmp.eq.s32.totalorder %s12, 0
      %p100 = por %p98, %p99
      %p101 = scmp.ne.s32.totalorder %s90, %s93
      %p102 = scmp.eq.s32.totalorder %s17, 3
      %p103 = por %p101, %p102
      %p104 = scmp.ne.s32.totalorder %s93, %s94
      %p105 = scmp.eq.s32.totalorder %s17, 0
      %p106 = por %p104, %p105
      %p107 = scmp.ne.s32.totalorder %s93, %s94
      %p108 = scmp.eq.s32.totalorder %s18, 3
      %p109 = por %p107, %p108
      %p111 = scmp.ne.s32.totalorder %s94, %s110
      %p112 = scmp.eq.s32.totalorder %s18, 0
      %p113 = por %p111, %p112
      %p114 = scmp.le.s32.totalorder 1, %s12
      %p115 = scmp.lt.s32.totalorder %s12, 5
      %p116 = pnand %p114, %p115
      %p117 = pneg %p116
      // Predicated region
      $region9: #{tpu_custom_call.1} parent=5 // pred_check
        _
      $region10: #{tpu_custom_call.1} parent=5 // pred_check_branch
        %119 = sbr.rel (%p116) target = $region12
      $region11: #{tpu_custom_call.1} parent=5 // pred_region
        %s120 = ssub.s32 %s12, 1
        // Predicated region
        $region13: #{tpu_custom_call.1} parent=11 // pred_check
          %p121 = pneg %p59
        $region14: #{tpu_custom_call.1} parent=11 // pred_check_branch
          %123 = sbr.rel (%p121) target = $region16
        $region15: #{tpu_custom_call.1} parent=11 // pred_region
          _
        $region16: #{tpu_custom_call.1} parent=11 // pred_fallthru
          _
        // Predicated region
        $region17: #{tpu_custom_call.1} parent=11 // pred_check
          %p124 = pneg %p80
        $region18: #{tpu_custom_call.1} parent=11 // pred_check_branch
          %126 = sbr.rel (%p124) target = $region20
        $region19: #{tpu_custom_call.1} parent=11 // pred_region
          _
        $region20: #{tpu_custom_call.1} parent=11 // pred_fallthru
          _
      $region12: #{tpu_custom_call.1} parent=5 // pred_fallthru
        _
      %p127 = scmp.lt.s32.totalorder %s12, 4
      // Predicated region
      $region21: #{tpu_custom_call.1} parent=5 // pred_check
        %p128 = pneg %p127
      $region22: #{tpu_custom_call.1} parent=5 // pred_check_branch
        %130 = sbr.rel (%p128) target = $region24
      $region23: #{tpu_custom_call.1} parent=5 // pred_region
        // Predicated region
        $region25: #{tpu_custom_call.1} parent=23 // pred_check
          %p131 = pneg %p32
        $region26: #{tpu_custom_call.1} parent=23 // pred_check_branch
          %133 = sbr.rel (%p131) target = $region28
        $region27: #{tpu_custom_call.1} parent=23 // pred_region
          %s134 = smul.u32 10, %s12
          %s135 = ssub.s32 38, %s134
          %p136 = scmp.lt.s32.totalorder %s135, 10
          %s137 = scalar_select %p136, %s135, 10
          %s138 = smul.u32 128, %s137
          %p139 = scmp.lt.s32.totalorder %s134, 37
          %s140 = scalar_select %p139, %s134, 37
          %s141 = smul.addr %s140, 8
          %s142 = scalar_lea.vmem %s0, %s141
          %s143 = smul.u32 10, %s12
          %s144 = ssub.s32 38, %s143
          %p145 = scmp.lt.s32.totalorder %s144, 10
          %s146 = scalar_select %p145, %s144, 10
          %s147 = smul.u32 128, %s146
        $region28: #{tpu_custom_call.1} parent=23 // pred_fallthru
          _
      $region24: #{tpu_custom_call.1} parent=5 // pred_fallthru
        _
      %p148 = scmp.le.s32.totalorder 1, %s12
      %p149 = scmp.lt.s32.totalorder %s12, 5
      %p150 = pnand %p148, %p149
      %p151 = pneg %p150
      // Predicated region
      $region29: #{tpu_custom_call.1} parent=5 // pred_check
        _
      $region30: #{tpu_custom_call.1} parent=5 // pred_check_branch
        %153 = sbr.rel (%p150) target = $region32
      $region31: #{tpu_custom_call.1} parent=5 // pred_region
        %s154 = ssub.s32 %s12, 1
        %s155 = smul.u32 10, %s17
        %s156 = ssub.s32 38, %s155
        %p157 = scmp.lt.s32.totalorder %s156, 10
        %s158 = scalar_select %p157, %s156, 10
        %s159 = smul.u32 128, %s158
        %p160 = scmp.lt.s32.totalorder %s155, 37
        %s161 = scalar_select %p160, %s155, 37
        %s162 = smul.addr %s161, 8
        %s163 = scalar_lea.vmem %s0, %s162
        %p164 = pneg %p38
        %p165 = pneg %p35
        %p166 = pneg %p59
        %p167 = pneg %p56
        %p168 = pneg %p80
        %p169 = pneg %p77
        %p170 = pneg %p106
        %p171 = pneg %p103
        %s172 = sand.u32 %s93, 1
        %s173 = scalar_lea.sflag [#allocation3], %s172
        %s174 = sand.u32 %s93, 1
        %s175 = smul.addr %s174, 80
        %s176 = scalar_lea.vmem [#allocation2], %s175
        %s177 = smul.u32 10, %s17
        %s178 = ssub.s32 38, %s177
        %p179 = scmp.lt.s32.totalorder %s178, 10
        %s180 = scalar_select %p179, %s178, 10
        %s181 = smul.u32 128, %s180
        %p182 = scmp.lt.s32.totalorder %s177, 37
        %s183 = scalar_select %p182, %s177, 37
        %s184 = smul.addr %s183, 8
        %s185 = scalar_lea.vmem %s0, %s184
        %s186 = smul.u32 10, %s17
        %s187 = ssub.s32 38, %s186
        %p188 = scmp.lt.s32.totalorder %s187, 10
        %s189 = scalar_select %p188, %s187, 10
        %s190 = smul.u32 128, %s189
        %s191 = smul.u32 10, %s17
        %s192 = ssub.s32 38, %s191
        %p193 = scmp.lt.s32.totalorder %s192, 10
        %s194 = scalar_select %p193, %s192, 10
        %s195 = smul.u32 128, %s194
        %v196 = vld [vmem:[%s185] sm:$0xff]
        %v197 = vld [vmem:[%s185 + $0x8] sm:$0xff]
        %v198 = vld [vmem:[%s185 + $0x10] sm:$0xff]
        %v199 = vld [vmem:[%s185 + $0x18] sm:$0xff]
        %v200 = vld [vmem:[%s185 + $0x20] sm:$0xff]
        %v201 = vld [vmem:[%s185 + $0x28] sm:$0xff]
        %v202 = vld [vmem:[%s185 + $0x30] sm:$0xff]
        %v203 = vld [vmem:[%s185 + $0x38] sm:$0xff]
        %v204 = vld [vmem:[%s185 + $0x40] sm:$0xff]
        %v205 = vld [vmem:[%s185 + $0x48] sm:$0xff]
        %v206 = vld [vmem:[%s1] sm:$0xff]
        %v207 = vld [vmem:[%s1 + $0x8] sm:$0xff]
        %v208 = vld [vmem:[%s1 + $0x10] sm:$0xff]
        %v209 = vld [vmem:[%s1 + $0x18] sm:$0xff]
        %v210 = vld [vmem:[%s2] sm:$0x1]
        %v212 = vlaneseq
        %v213 = vshrl.u32 %v212, 7
        %v214 = vsub.s32 0, %v213
        %v215 = vrot.slane %v210, %v214
        %vm217 = vcmask 261120
        %v219 = vsel %vm217, %v196, 0
        %v222 = vsel %vm217, %v197, 0
        %v225 = vsel %vm217, %v198, 0
        %v228 = vsel %vm217, %v199, 0
        %v231 = vsel %vm217, %v200, 0
        %v234 = vsel %vm217, %v201, 0
        %v237 = vsel %vm217, %v202, 0
        %v240 = vsel %vm217, %v203, 0
        %v243 = vsel %vm217, %v204, 0
        %v246 = vsel %vm217, %v205, 0
        %248 = vmatprep.subr.mxu0 0.0
        %249 = vmatpush1.msra.mxu0 0.0
        %250 = vmatprep.subr.mxu0 0.0
        %251 = vmatpush1.msra.mxu0 0.0
        %252 = vmatprep.subr.mxu0 0.0
        %253 = vmatpush1.msra.mxu0 0.0
        %254 = vmatprep.subr.mxu0 0.0
        %255 = vmatpush1.msra.mxu0 0.0
        %256 = vmatprep.subr.mxu0 0.0
        %257 = vmatpush1.msra.mxu0 0.0
        %258 = vmatprep.subr.mxu0 0.0
        %259 = vmatpush1.msra.mxu0 0.0
        %260 = vmatprep.subr.mxu0 0.0
        %261 = vmatpush1.msra.mxu0 0.0
        %262 = vmatprep.subr.mxu0 0.0
        %263 = vmatpush1.msra.mxu0 0.0
        %264 = vmatprep.subr.mxu0 0.0
        %265 = vmatpush1.msra.mxu0 0.0
        %266 = vmatprep.subr.mxu0 0.0
        %267 = vmatpush1.msra.mxu0 0.0
        %268 = vmatprep.subr.mxu0 0.0
        %269 = vmatpush1.msra.mxu0 0.0
        %270 = vmatprep.subr.mxu0 0.0
        %271 = vmatpush1.msra.mxu0 0.0
        %272 = vmatprep.subr.mxu0 0.0
        %273 = vmatpush1.msra.mxu0 %v209
        %274 = vmatprep.subr.mxu0 0.0
        %275 = vmatpush1.msra.mxu0 %v208
        %276 = vmatprep.subr.mxu0 0.0
        %277 = vmatpush1.msra.mxu0 %v207
        %278 = vmatprep.subr.mxu0 0.0
        %279 = vmatpush1.msra.mxu0 %v206
        %280 = vmatprep.subr.mxu0 0.0
        %281 = vmatpush2.msra.mxu0 0.0
        %282 = vmatprep.subr.mxu0 0.0
        %283 = vmatpush2.msra.mxu0 0.0
        %284 = vmatprep.subr.mxu0 0.0
        %285 = vmatpush2.msra.mxu0 0.0
        %286 = vmatprep.subr.mxu0 0.0
        %287 = vmatpush2.msra.mxu0 0.0
        %288 = vmatprep.subr.mxu0 0.0
        %289 = vmatpush2.msra.mxu0 0.0
        %290 = vmatprep.subr.mxu0 0.0
        %291 = vmatpush2.msra.mxu0 0.0
        %292 = vmatprep.subr.mxu0 0.0
        %293 = vmatpush2.msra.mxu0 0.0
        %294 = vmatprep.subr.mxu0 0.0
        %295 = vmatpush2.msra.mxu0 0.0
        %296 = vmatprep.subr.mxu0 0.0
        %297 = vmatpush2.msra.mxu0 0.0
        %298 = vmatprep.subr.mxu0 0.0
        %299 = vmatpush2.msra.mxu0 0.0
        %300 = vmatprep.subr.mxu0 0.0
        %301 = vmatpush2.msra.mxu0 0.0
        %302 = vmatprep.subr.mxu0 0.0
        %303 = vmatpush2.msra.mxu0 0.0
        %304 = vmatprep.subr.mxu0 0.0
        %305 = vmatpush2.msra.mxu0 0.0
        %306 = vmatprep.subr.mxu0 0.0
        %307 = vmatpush2.msra.mxu0 0.0
        %308 = vmatprep.subr.mxu0 0.0
        %309 = vmatpush2.msra.mxu0 0.0
        %310 = vmatprep.subr.mxu0 0.0
        %311 = vmatpush2.msra.mxu0 0.0
        %312 = vmatprep.mubr.f32.mxu0 0.0
        %313 = vmatmul.mubr.f32.gmra.mxu0 %v219
        %v314 = vpop.f32.mrf.mxu0
        %v315 = vadd.f32 %v215, %v314
        %v316 = vpop.f32.mrf.mxu0
        %317 = vmatprep.mubr.f32.mxu0 0.0
        %318 = vmatmul.mubr.f32.gmra.mxu0 %v222
        %v319 = vpop.f32.mrf.mxu0
        %v320 = vadd.f32 %v215, %v319
        %v321 = vpop.f32.mrf.mxu0
        %322 = vmatprep.mubr.f32.mxu0 0.0
        %323 = vmatmul.mubr.f32.gmra.mxu0 %v225
        %v324 = vpop.f32.mrf.mxu0
        %v325 = vadd.f32 %v215, %v324
        %v326 = vpop.f32.mrf.mxu0
        %327 = vmatprep.mubr.f32.mxu0 0.0
        %328 = vmatmul.mubr.f32.gmra.mxu0 %v228
        %v329 = vpop.f32.mrf.mxu0
        %v330 = vadd.f32 %v215, %v329
        %v331 = vpop.f32.mrf.mxu0
        %332 = vmatprep.mubr.f32.mxu0 0.0
        %333 = vmatmul.mubr.f32.gmra.mxu0 %v231
        %v334 = vpop.f32.mrf.mxu0
        %v335 = vadd.f32 %v215, %v334
        %v336 = vpop.f32.mrf.mxu0
        %337 = vmatprep.mubr.f32.mxu0 0.0
        %338 = vmatmul.mubr.f32.gmra.mxu0 %v234
        %v339 = vpop.f32.mrf.mxu0
        %v340 = vadd.f32 %v215, %v339
        %v341 = vpop.f32.mrf.mxu0
        %342 = vmatprep.mubr.f32.mxu0 0.0
        %343 = vmatmul.mubr.f32.gmra.mxu0 %v237
        %v344 = vpop.f32.mrf.mxu0
        %v345 = vadd.f32 %v215, %v344
        %v346 = vpop.f32.mrf.mxu0
        %347 = vmatprep.mubr.f32.mxu0 0.0
        %348 = vmatmul.mubr.f32.gmra.mxu0 %v240
        %v349 = vpop.f32.mrf.mxu0
        %v350 = vadd.f32 %v215, %v349
        %v351 = vpop.f32.mrf.mxu0
        %352 = vmatprep.mubr.f32.mxu0 0.0
        %353 = vmatmul.mubr.f32.gmra.mxu0 %v243
        %v354 = vpop.f32.mrf.mxu0
        %v355 = vadd.f32 %v215, %v354
        %v356 = vpop.f32.mrf.mxu0
        %357 = vmatprep.mubr.f32.mxu0 0.0
        %358 = vmatmul.mubr.f32.gmra.mxu0 %v246
        %v359 = vpop.f32.mrf.mxu0
        %v360 = vadd.f32 %v215, %v359
        %v361 = vpop.f32.mrf.mxu0
        %362 = vdwg.mxu0
        %v363 = vand.u32 2147483647, %v315
        %v364 = vand.u32 2147483647, %v320
        %v365 = vand.u32 2147483647, %v325
        %v366 = vand.u32 2147483647, %v330
        %v367 = vand.u32 2147483647, %v335
        %v368 = vand.u32 2147483647, %v340
        %v369 = vand.u32 2147483647, %v345
        %v370 = vand.u32 2147483647, %v350
        %v371 = vand.u32 2147483647, %v355
        %v372 = vand.u32 2147483647, %v360
        %v373 = vadd.f32 %v363, 1.0
        %v374 = vadd.f32 %v364, 1.0
        %v375 = vadd.f32 %v365, 1.0
        %v376 = vadd.f32 %v366, 1.0
        %v377 = vadd.f32 %v367, 1.0
        %v378 = vadd.f32 %v368, 1.0
        %v379 = vadd.f32 %v369, 1.0
        %v380 = vadd.f32 %v370, 1.0
        %v381 = vadd.f32 %v371, 1.0
        %v382 = vadd.f32 %v372, 1.0
        %v383 = vmul.f32 %v373, 30.0
        %v384 = vmul.f32 %v374, 30.0
        %v385 = vmul.f32 %v375, 30.0
        %v386 = vmul.f32 %v376, 30.0
        %v387 = vmul.f32 %v377, 30.0
        %v388 = vmul.f32 %v378, 30.0
        %v389 = vmul.f32 %v379, 30.0
        %v390 = vmul.f32 %v380, 30.0
        %v391 = vmul.f32 %v381, 30.0
        %v392 = vmul.f32 %v382, 30.0
        %v393 = vmul.f32 %v383, %v315
        %v394 = vmul.f32 %v384, %v320
        %v395 = vmul.f32 %v385, %v325
        %v396 = vmul.f32 %v386, %v330
        %v397 = vmul.f32 %v387, %v335
        %v398 = vmul.f32 %v388, %v340
        %v399 = vmul.f32 %v389, %v345
        %v400 = vmul.f32 %v390, %v350
        %v401 = vmul.f32 %v391, %v355
        %v402 = vmul.f32 %v392, %v360
        %v403 = vand.u32 2147483647, %v393
        %vm404 = vcmp.le.f32.partialorder %v403, 0.7853982
        %vm405 = vcmp.lt.s32.totalorder %v393, 0
        %v406 = vand.u32 %v393, 2139095040
        %v407 = vshrl.u32 %v406, 23
        %v408 = vsub.s32 %v407, 127
        %v409 = vand.u32 2147483647, %v393
        %v410 = vand.u32 %v409, 8388607
        %v411 = vor.u32 %v410, 8388608
        %v412 = vsub.s32 0, %v411
        %v413 = vadd.s32 %v408, 1
        %vm414 = vcmp.gt.s32.totalorder %v413, 0
        %v415 = vsel %vm414, %v413, 0
        %v416 = vshrl.u32 %v415, 5
        %v417 = vand.u32 %v415, 31
        %v418 = vsub.s32 32, %v417
        %v419 = vshrl.u32 683565275, %v418
        %v420 = vshll.u32 683565275, %v417
        %v421 = vshrl.u32 2475754826, %v418
        %v422 = vor.u32 %v420, %v421
        %v423 = vshll.u32 2475754826, %v417
        %v424 = vshrl.u32 2131351028, %v418
        %v425 = vor.u32 %v423, %v424
        %v426 = vshll.u32 2131351028, %v417
        %v427 = vshrl.u32 2102212464, %v418
        %v428 = vor.u32 %v426, %v427
        %v429 = vshll.u32 2102212464, %v417
        %v430 = vshrl.u32 920167782, %v418
        %v431 = vor.u32 %v429, %v430
        %v432 = vshll.u32 920167782, %v417
        %v433 = vshrl.u32 1326507024, %v418
        %v434 = vor.u32 %v432, %v433
        %vm435 = vcmp.lt.s32.totalorder %v416, 1
        %vm436 = vcmp.lt.s32.totalorder %v416, 2
        %vm437 = vcmp.lt.s32.totalorder %v416, 3
        %vm438 = vcmp.lt.s32.totalorder %v416, 4
        %v439 = vsel %vm435, %v419, %v422
        %v440 = vsel %vm438, %v428, 2102212464
        %v441 = vsel %vm437, %v425, %v440
        %v442 = vsel %vm436, %v439, %v441
        %v443 = vsel %vm435, %v422, %v425
        %v444 = vsel %vm438, %v431, 920167782
        %v445 = vsel %vm437, %v428, %v444
        %v446 = vsel %vm436, %v443, %v445
        %v447 = vsel %vm435, %v425, %v428
        %v448 = vsel %vm438, %v434, 1326507024
        %v449 = vsel %vm437, %v431, %v448
        %v450 = vsel %vm436, %v447, %v449
        %v451 = vshll.u32 %v411, 8
        %v452 = vmul.u32.u64.compose %v451, %v450
        %v453 = vextract.low.u32 %v452
        %v454 = vextract.high.u32 %v452
        %v455 = vmul.u32.u64.compose %v451, %v446
        %v456 = vextract.low.u32 %v455
        %v457 = vextract.high.u32 %v455
        %v458 = vmul.u32 %v451, %v442
        %v459 = vadd.s32 %v454, %v456
        %vm460 = vc.u32 %v454, %v456
        %v461 = vadd.s32 %v457, 1
        %v462 = vsel %vm460, %v461, %v457
        %v463 = vadd.s32 %v458, %v462
        %v464 = vadd.s32 %v463, 536870912
        %v465 = vshrl.u32 %v464, 30
        %v466 = vshll.u32 %v465, 30
        %v467 = vsub.s32 %v463, %v466
        %vm468 = vcmp.lt.s32.totalorder %v467, 0
        %v469 = vsub.s32 0, %v467
        %v470 = vsel %vm468, %v469, %v467
        %v471 = vclz %v470
        %v472 = vsub.s32 %v471, 2
        %vm473 = vcmp.gt.s32.totalorder 0, %v472
        %v474 = vsel %vm473, 0, %v472
        %v475 = vsub.s32 32, %v474
        %v476 = vshll.u32 %v467, %v474
        %v477 = vshrl.u32 %v459, %v475
        %v478 = vor.u32 %v476, %v477
        %v479 = vsub.s32 4294967266, %v474
        %v480 = vadd.s32 %v479, 127
        %v481 = vshll.u32 %v480, 23
        %v482 = vor.u32 4788187, %v481
        %v483 = vand.u32 2147483647, %v482
        %v485 = vcvt.s32.f32 %v478
        %v486 = vmul.f32 %v485, %v483
        %v487 = vxor.u32 %v486, 2147483648
        %v488 = vsel %vm405, %v487, %v486
        %v489 = vsub.s32 4, %v465
        %v490 = vsel %vm405, %v489, %v465
        %v491 = vsel %vm404, %v393, %v488
        %v492 = vsel %vm404, 0, %v490
        %v493 = vcosq.f32.pop %v491
        %v494 = vsinq.f32.pop %v491
        %vm495 = vweird.f32 %v393
        %v496 = vadd.s32 %v492, 3
        %v497 = vand.u32 %v496, 3
        %vm498 = vcmp.lt.s32.totalorder %v497, 2
        %vm499 = vcmp.eq.s32.totalorder %v497, 0
        %v500 = vxor.u32 %v494, 2147483648
        %v501 = vsel %vm499, %v493, %v500
        %vm502 = vcmp.eq.s32.totalorder %v497, 2
        %v503 = vxor.u32 %v493, 2147483648
        %v504 = vsel %vm502, %v503, %v494
        %v505 = vsel %vm498, %v501, %v504
        %v506 = vsel %vm495, nan, %v505
        %v507 = vand.u32 2147483647, %v394
        %vm508 = vcmp.le.f32.partialorder %v507, 0.7853982
        %vm509 = vcmp.lt.s32.totalorder %v394, 0
        %v510 = vand.u32 %v394, 2139095040
        %v511 = vshrl.u32 %v510, 23
        %v512 = vsub.s32 %v511, 127
        %v513 = vand.u32 2147483647, %v394
        %v514 = vand.u32 %v513, 8388607
        %v515 = vor.u32 %v514, 8388608
        %v516 = vsub.s32 0, %v515
        %v517 = vadd.s32 %v512, 1
        %vm518 = vcmp.gt.s32.totalorder %v517, 0
        %v519 = vsel %vm518, %v517, 0
        %v520 = vshrl.u32 %v519, 5
        %v521 = vand.u32 %v519, 31
        %v522 = vsub.s32 32, %v521
        %v523 = vshrl.u32 683565275, %v522
        %v524 = vshll.u32 683565275, %v521
        %v525 = vshrl.u32 2475754826, %v522
        %v526 = vor.u32 %v524, %v525
        %v527 = vshll.u32 2475754826, %v521
        %v528 = vshrl.u32 2131351028, %v522
        %v529 = vor.u32 %v527, %v528
        %v530 = vshll.u32 2131351028, %v521
        %v531 = vshrl.u32 2102212464, %v522
        %v532 = vor.u32 %v530, %v531
        %v533 = vshll.u32 2102212464, %v521
        %v534 = vshrl.u32 920167782, %v522
        %v535 = vor.u32 %v533, %v534
        %v536 = vshll.u32 920167782, %v521
        %v537 = vshrl.u32 1326507024, %v522
        %v538 = vor.u32 %v536, %v537
        %vm539 = vcmp.lt.s32.totalorder %v520, 1
        %vm540 = vcmp.lt.s32.totalorder %v520, 2
        %vm541 = vcmp.lt.s32.totalorder %v520, 3
        %vm542 = vcmp.lt.s32.totalorder %v520, 4
        %v543 = vsel %vm539, %v523, %v526
        %v544 = vsel %vm542, %v532, 2102212464
        %v545 = vsel %vm541, %v529, %v544
        %v546 = vsel %vm540, %v543, %v545
        %v547 = vsel %vm539, %v526, %v529
        %v548 = vsel %vm542, %v535, 920167782
        %v549 = vsel %vm541, %v532, %v548
        %v550 = vsel %vm540, %v547, %v549
        %v551 = vsel %vm539, %v529, %v532
        %v552 = vsel %vm542, %v538, 1326507024
        %v553 = vsel %vm541, %v535, %v552
        %v554 = vsel %vm540, %v551, %v553
        %v555 = vshll.u32 %v515, 8
        %v556 = vmul.u32.u64.compose %v555, %v554
        %v557 = vextract.low.u32 %v556
        %v558 = vextract.high.u32 %v556
        %v559 = vmul.u32.u64.compose %v555, %v550
        %v560 = vextract.low.u32 %v559
        %v561 = vextract.high.u32 %v559
        %v562 = vmul.u32 %v555, %v546
        %v563 = vadd.s32 %v558, %v560
        %vm564 = vc.u32 %v558, %v560
        %v565 = vadd.s32 %v561, 1
        %v566 = vsel %vm564, %v565, %v561
        %v567 = vadd.s32 %v562, %v566
        %v568 = vadd.s32 %v567, 536870912
        %v569 = vshrl.u32 %v568, 30
        %v570 = vshll.u32 %v569, 30
        %v571 = vsub.s32 %v567, %v570
        %vm572 = vcmp.lt.s32.totalorder %v571, 0
        %v573 = vsub.s32 0, %v571
        %v574 = vsel %vm572, %v573, %v571
        %v575 = vclz %v574
        %v576 = vsub.s32 %v575, 2
        %vm577 = vcmp.gt.s32.totalorder 0, %v576
        %v578 = vsel %vm577, 0, %v576
        %v579 = vsub.s32 32, %v578
        %v580 = vshll.u32 %v571, %v578
        %v581 = vshrl.u32 %v563, %v579
        %v582 = vor.u32 %v580, %v581
        %v583 = vsub.s32 4294967266, %v578
        %v584 = vadd.s32 %v583, 127
        %v585 = vshll.u32 %v584, 23
        %v586 = vor.u32 4788187, %v585
        %v587 = vand.u32 2147483647, %v586
        %v589 = vcvt.s32.f32 %v582
        %v590 = vmul.f32 %v589, %v587
        %v591 = vxor.u32 %v590, 2147483648
        %v592 = vsel %vm509, %v591, %v590
        %v593 = vsub.s32 4, %v569
        %v594 = vsel %vm509, %v593, %v569
        %v595 = vsel %vm508, %v394, %v592
        %v596 = vsel %vm508, 0, %v594
        %v597 = vcosq.f32.pop %v595
        %v598 = vsinq.f32.pop %v595
        %vm599 = vweird.f32 %v394
        %v600 = vadd.s32 %v596, 3
        %v601 = vand.u32 %v600, 3
        %vm602 = vcmp.lt.s32.totalorder %v601, 2
        %vm603 = vcmp.eq.s32.totalorder %v601, 0
        %v604 = vxor.u32 %v598, 2147483648
        %v605 = vsel %vm603, %v597, %v604
        %vm606 = vcmp.eq.s32.totalorder %v601, 2
        %v607 = vxor.u32 %v597, 2147483648
        %v608 = vsel %vm606, %v607, %v598
        %v609 = vsel %vm602, %v605, %v608
        %v610 = vsel %vm599, nan, %v609
        %v611 = vand.u32 2147483647, %v395
        %vm612 = vcmp.le.f32.partialorder %v611, 0.7853982
        %vm613 = vcmp.lt.s32.totalorder %v395, 0
        %v614 = vand.u32 %v395, 2139095040
        %v615 = vshrl.u32 %v614, 23
        %v616 = vsub.s32 %v615, 127
        %v617 = vand.u32 2147483647, %v395
        %v618 = vand.u32 %v617, 8388607
        %v619 = vor.u32 %v618, 8388608
        %v620 = vsub.s32 0, %v619
        %v621 = vadd.s32 %v616, 1
        %vm622 = vcmp.gt.s32.totalorder %v621, 0
        %v623 = vsel %vm622, %v621, 0
        %v624 = vshrl.u32 %v623, 5
        %v625 = vand.u32 %v623, 31
        %v626 = vsub.s32 32, %v625
        %v627 = vshrl.u32 683565275, %v626
        %v628 = vshll.u32 683565275, %v625
        %v629 = vshrl.u32 2475754826, %v626
        %v630 = vor.u32 %v628, %v629
        %v631 = vshll.u32 2475754826, %v625
        %v632 = vshrl.u32 2131351028, %v626
        %v633 = vor.u32 %v631, %v632
        %v634 = vshll.u32 2131351028, %v625
        %v635 = vshrl.u32 2102212464, %v626
        %v636 = vor.u32 %v634, %v635
        %v637 = vshll.u32 2102212464, %v625
        %v638 = vshrl.u32 920167782, %v626
        %v639 = vor.u32 %v637, %v638
        %v640 = vshll.u32 920167782, %v625
        %v641 = vshrl.u32 1326507024, %v626
        %v642 = vor.u32 %v640, %v641
        %vm643 = vcmp.lt.s32.totalorder %v624, 1
        %vm644 = vcmp.lt.s32.totalorder %v624, 2
        %vm645 = vcmp.lt.s32.totalorder %v624, 3
        %vm646 = vcmp.lt.s32.totalorder %v624, 4
        %v647 = vsel %vm643, %v627, %v630
        %v648 = vsel %vm646, %v636, 2102212464
        %v649 = vsel %vm645, %v633, %v648
        %v650 = vsel %vm644, %v647, %v649
        %v651 = vsel %vm643, %v630, %v633
        %v652 = vsel %vm646, %v639, 920167782
        %v653 = vsel %vm645, %v636, %v652
        %v654 = vsel %vm644, %v651, %v653
        %v655 = vsel %vm643, %v633, %v636
        %v656 = vsel %vm646, %v642, 1326507024
        %v657 = vsel %vm645, %v639, %v656
        %v658 = vsel %vm644, %v655, %v657
        %v659 = vshll.u32 %v619, 8
        %v660 = vmul.u32.u64.compose %v659, %v658
        %v661 = vextract.low.u32 %v660
        %v662 = vextract.high.u32 %v660
        %v663 = vmul.u32.u64.compose %v659, %v654
        %v664 = vextract.low.u32 %v663
        %v665 = vextract.high.u32 %v663
        %v666 = vmul.u32 %v659, %v650
        %v667 = vadd.s32 %v662, %v664
        %vm668 = vc.u32 %v662, %v664
        %v669 = vadd.s32 %v665, 1
        %v670 = vsel %vm668, %v669, %v665
        %v671 = vadd.s32 %v666, %v670
        %v672 = vadd.s32 %v671, 536870912
        %v673 = vshrl.u32 %v672, 30
        %v674 = vshll.u32 %v673, 30
        %v675 = vsub.s32 %v671, %v674
        %vm676 = vcmp.lt.s32.totalorder %v675, 0
        %v677 = vsub.s32 0, %v675
        %v678 = vsel %vm676, %v677, %v675
        %v679 = vclz %v678
        %v680 = vsub.s32 %v679, 2
        %vm681 = vcmp.gt.s32.totalorder 0, %v680
        %v682 = vsel %vm681, 0, %v680
        %v683 = vsub.s32 32, %v682
        %v684 = vshll.u32 %v675, %v682
        %v685 = vshrl.u32 %v667, %v683
        %v686 = vor.u32 %v684, %v685
        %v687 = vsub.s32 4294967266, %v682
        %v688 = vadd.s32 %v687, 127
        %v689 = vshll.u32 %v688, 23
        %v690 = vor.u32 4788187, %v689
        %v691 = vand.u32 2147483647, %v690
        %v693 = vcvt.s32.f32 %v686
        %v694 = vmul.f32 %v693, %v691
        %v695 = vxor.u32 %v694, 2147483648
        %v696 = vsel %vm613, %v695, %v694
        %v697 = vsub.s32 4, %v673
        %v698 = vsel %vm613, %v697, %v673
        %v699 = vsel %vm612, %v395, %v696
        %v700 = vsel %vm612, 0, %v698
        %v701 = vcosq.f32.pop %v699
        %v702 = vsinq.f32.pop %v699
        %vm703 = vweird.f32 %v395
        %v704 = vadd.s32 %v700, 3
        %v705 = vand.u32 %v704, 3
        %vm706 = vcmp.lt.s32.totalorder %v705, 2
        %vm707 = vcmp.eq.s32.totalorder %v705, 0
        %v708 = vxor.u32 %v702, 2147483648
        %v709 = vsel %vm707, %v701, %v708
        %vm710 = vcmp.eq.s32.totalorder %v705, 2
        %v711 = vxor.u32 %v701, 2147483648
        %v712 = vsel %vm710, %v711, %v702
        %v713 = vsel %vm706, %v709, %v712
        %v714 = vsel %vm703, nan, %v713
        %v715 = vand.u32 2147483647, %v396
        %vm716 = vcmp.le.f32.partialorder %v715, 0.7853982
        %vm717 = vcmp.lt.s32.totalorder %v396, 0
        %v718 = vand.u32 %v396, 2139095040
        %v719 = vshrl.u32 %v718, 23
        %v720 = vsub.s32 %v719, 127
        %v721 = vand.u32 2147483647, %v396
        %v722 = vand.u32 %v721, 8388607
        %v723 = vor.u32 %v722, 8388608
        %v724 = vsub.s32 0, %v723
        %v725 = vadd.s32 %v720, 1
        %vm726 = vcmp.gt.s32.totalorder %v725, 0
        %v727 = vsel %vm726, %v725, 0
        %v728 = vshrl.u32 %v727, 5
        %v729 = vand.u32 %v727, 31
        %v730 = vsub.s32 32, %v729
        %v731 = vshrl.u32 683565275, %v730
        %v732 = vshll.u32 683565275, %v729
        %v733 = vshrl.u32 2475754826, %v730
        %v734 = vor.u32 %v732, %v733
        %v735 = vshll.u32 2475754826, %v729
        %v736 = vshrl.u32 2131351028, %v730
        %v737 = vor.u32 %v735, %v736
        %v738 = vshll.u32 2131351028, %v729
        %v739 = vshrl.u32 2102212464, %v730
        %v740 = vor.u32 %v738, %v739
        %v741 = vshll.u32 2102212464, %v729
        %v742 = vshrl.u32 920167782, %v730
        %v743 = vor.u32 %v741, %v742
        %v744 = vshll.u32 920167782, %v729
        %v745 = vshrl.u32 1326507024, %v730
        %v746 = vor.u32 %v744, %v745
        %vm747 = vcmp.lt.s32.totalorder %v728, 1
        %vm748 = vcmp.lt.s32.totalorder %v728, 2
        %vm749 = vcmp.lt.s32.totalorder %v728, 3
        %vm750 = vcmp.lt.s32.totalorder %v728, 4
        %v751 = vsel %vm747, %v731, %v734
        %v752 = vsel %vm750, %v740, 2102212464
        %v753 = vsel %vm749, %v737, %v752
        %v754 = vsel %vm748, %v751, %v753
        %v755 = vsel %vm747, %v734, %v737
        %v756 = vsel %vm750, %v743, 920167782
        %v757 = vsel %vm749, %v740, %v756
        %v758 = vsel %vm748, %v755, %v757
        %v759 = vsel %vm747, %v737, %v740
        %v760 = vsel %vm750, %v746, 1326507024
        %v761 = vsel %vm749, %v743, %v760
        %v762 = vsel %vm748, %v759, %v761
        %v763 = vshll.u32 %v723, 8
        %v764 = vmul.u32.u64.compose %v763, %v762
        %v765 = vextract.low.u32 %v764
        %v766 = vextract.high.u32 %v764
        %v767 = vmul.u32.u64.compose %v763, %v758
        %v768 = vextract.low.u32 %v767
        %v769 = vextract.high.u32 %v767
        %v770 = vmul.u32 %v763, %v754
        %v771 = vadd.s32 %v766, %v768
        %vm772 = vc.u32 %v766, %v768
        %v773 = vadd.s32 %v769, 1
        %v774 = vsel %vm772, %v773, %v769
        %v775 = vadd.s32 %v770, %v774
        %v776 = vadd.s32 %v775, 536870912
        %v777 = vshrl.u32 %v776, 30
        %v778 = vshll.u32 %v777, 30
        %v779 = vsub.s32 %v775, %v778
        %vm780 = vcmp.lt.s32.totalorder %v779, 0
        %v781 = vsub.s32 0, %v779
        %v782 = vsel %vm780, %v781, %v779
        %v783 = vclz %v782
        %v784 = vsub.s32 %v783, 2
        %vm785 = vcmp.gt.s32.totalorder 0, %v784
        %v786 = vsel %vm785, 0, %v784
        %v787 = vsub.s32 32, %v786
        %v788 = vshll.u32 %v779, %v786
        %v789 = vshrl.u32 %v771, %v787
        %v790 = vor.u32 %v788, %v789
        %v791 = vsub.s32 4294967266, %v786
        %v792 = vadd.s32 %v791, 127
        %v793 = vshll.u32 %v792, 23
        %v794 = vor.u32 4788187, %v793
        %v795 = vand.u32 2147483647, %v794
        %v797 = vcvt.s32.f32 %v790
        %v798 = vmul.f32 %v797, %v795
        %v799 = vxor.u32 %v798, 2147483648
        %v800 = vsel %vm717, %v799, %v798
        %v801 = vsub.s32 4, %v777
        %v802 = vsel %vm717, %v801, %v777
        %v803 = vsel %vm716, %v396, %v800
        %v804 = vsel %vm716, 0, %v802
        %v805 = vcosq.f32.pop %v803
        %v806 = vsinq.f32.pop %v803
        %vm807 = vweird.f32 %v396
        %v808 = vadd.s32 %v804, 3
        %v809 = vand.u32 %v808, 3
        %vm810 = vcmp.lt.s32.totalorder %v809, 2
        %vm811 = vcmp.eq.s32.totalorder %v809, 0
        %v812 = vxor.u32 %v806, 2147483648
        %v813 = vsel %vm811, %v805, %v812
        %vm814 = vcmp.eq.s32.totalorder %v809, 2
        %v815 = vxor.u32 %v805, 2147483648
        %v816 = vsel %vm814, %v815, %v806
        %v817 = vsel %vm810, %v813, %v816
        %v818 = vsel %vm807, nan, %v817
        %v819 = vand.u32 2147483647, %v397
        %vm820 = vcmp.le.f32.partialorder %v819, 0.7853982
        %vm821 = vcmp.lt.s32.totalorder %v397, 0
        %v822 = vand.u32 %v397, 2139095040
        %v823 = vshrl.u32 %v822, 23
        %v824 = vsub.s32 %v823, 127
        %v825 = vand.u32 2147483647, %v397
        %v826 = vand.u32 %v825, 8388607
        %v827 = vor.u32 %v826, 8388608
        %v828 = vsub.s32 0, %v827
        %v829 = vadd.s32 %v824, 1
        %vm830 = vcmp.gt.s32.totalorder %v829, 0
        %v831 = vsel %vm830, %v829, 0
        %v832 = vshrl.u32 %v831, 5
        %v833 = vand.u32 %v831, 31
        %v834 = vsub.s32 32, %v833
        %v835 = vshrl.u32 683565275, %v834
        %v836 = vshll.u32 683565275, %v833
        %v837 = vshrl.u32 2475754826, %v834
        %v838 = vor.u32 %v836, %v837
        %v839 = vshll.u32 2475754826, %v833
        %v840 = vshrl.u32 2131351028, %v834
        %v841 = vor.u32 %v839, %v840
        %v842 = vshll.u32 2131351028, %v833
        %v843 = vshrl.u32 2102212464, %v834
        %v844 = vor.u32 %v842, %v843
        %v845 = vshll.u32 2102212464, %v833
        %v846 = vshrl.u32 920167782, %v834
        %v847 = vor.u32 %v845, %v846
        %v848 = vshll.u32 920167782, %v833
        %v849 = vshrl.u32 1326507024, %v834
        %v850 = vor.u32 %v848, %v849
        %vm851 = vcmp.lt.s32.totalorder %v832, 1
        %vm852 = vcmp.lt.s32.totalorder %v832, 2
        %vm853 = vcmp.lt.s32.totalorder %v832, 3
        %vm854 = vcmp.lt.s32.totalorder %v832, 4
        %v855 = vsel %vm851, %v835, %v838
        %v856 = vsel %vm854, %v844, 2102212464
        %v857 = vsel %vm853, %v841, %v856
        %v858 = vsel %vm852, %v855, %v857
        %v859 = vsel %vm851, %v838, %v841
        %v860 = vsel %vm854, %v847, 920167782
        %v861 = vsel %vm853, %v844, %v860
        %v862 = vsel %vm852, %v859, %v861
        %v863 = vsel %vm851, %v841, %v844
        %v864 = vsel %vm854, %v850, 1326507024
        %v865 = vsel %vm853, %v847, %v864
        %v866 = vsel %vm852, %v863, %v865
        %v867 = vshll.u32 %v827, 8
        %v868 = vmul.u32.u64.compose %v867, %v866
        %v869 = vextract.low.u32 %v868
        %v870 = vextract.high.u32 %v868
        %v871 = vmul.u32.u64.compose %v867, %v862
        %v872 = vextract.low.u32 %v871
        %v873 = vextract.high.u32 %v871
        %v874 = vmul.u32 %v867, %v858
        %v875 = vadd.s32 %v870, %v872
        %vm876 = vc.u32 %v870, %v872
        %v877 = vadd.s32 %v873, 1
        %v878 = vsel %vm876, %v877, %v873
        %v879 = vadd.s32 %v874, %v878
        %v880 = vadd.s32 %v879, 536870912
        %v881 = vshrl.u32 %v880, 30
        %v882 = vshll.u32 %v881, 30
        %v883 = vsub.s32 %v879, %v882
        %vm884 = vcmp.lt.s32.totalorder %v883, 0
        %v885 = vsub.s32 0, %v883
        %v886 = vsel %vm884, %v885, %v883
        %v887 = vclz %v886
        %v888 = vsub.s32 %v887, 2
        %vm889 = vcmp.gt.s32.totalorder 0, %v888
        %v890 = vsel %vm889, 0, %v888
        %v891 = vsub.s32 32, %v890
        %v892 = vshll.u32 %v883, %v890
        %v893 = vshrl.u32 %v875, %v891
        %v894 = vor.u32 %v892, %v893
        %v895 = vsub.s32 4294967266, %v890
        %v896 = vadd.s32 %v895, 127
        %v897 = vshll.u32 %v896, 23
        %v898 = vor.u32 4788187, %v897
        %v899 = vand.u32 2147483647, %v898
        %v901 = vcvt.s32.f32 %v894
        %v902 = vmul.f32 %v901, %v899
        %v903 = vxor.u32 %v902, 2147483648
        %v904 = vsel %vm821, %v903, %v902
        %v905 = vsub.s32 4, %v881
        %v906 = vsel %vm821, %v905, %v881
        %v907 = vsel %vm820, %v397, %v904
        %v908 = vsel %vm820, 0, %v906
        %v909 = vcosq.f32.pop %v907
        %v910 = vsinq.f32.pop %v907
        %vm911 = vweird.f32 %v397
        %v912 = vadd.s32 %v908, 3
        %v913 = vand.u32 %v912, 3
        %vm914 = vcmp.lt.s32.totalorder %v913, 2
        %vm915 = vcmp.eq.s32.totalorder %v913, 0
        %v916 = vxor.u32 %v910, 2147483648
        %v917 = vsel %vm915, %v909, %v916
        %vm918 = vcmp.eq.s32.totalorder %v913, 2
        %v919 = vxor.u32 %v909, 2147483648
        %v920 = vsel %vm918, %v919, %v910
        %v921 = vsel %vm914, %v917, %v920
        %v922 = vsel %vm911, nan, %v921
        %v923 = vand.u32 2147483647, %v398
        %vm924 = vcmp.le.f32.partialorder %v923, 0.7853982
        %vm925 = vcmp.lt.s32.totalorder %v398, 0
        %v926 = vand.u32 %v398, 2139095040
        %v927 = vshrl.u32 %v926, 23
        %v928 = vsub.s32 %v927, 127
        %v929 = vand.u32 2147483647, %v398
        %v930 = vand.u32 %v929, 8388607
        %v931 = vor.u32 %v930, 8388608
        %v932 = vsub.s32 0, %v931
        %v933 = vadd.s32 %v928, 1
        %vm934 = vcmp.gt.s32.totalorder %v933, 0
        %v935 = vsel %vm934, %v933, 0
        %v936 = vshrl.u32 %v935, 5
        %v937 = vand.u32 %v935, 31
        %v938 = vsub.s32 32, %v937
        %v939 = vshrl.u32 683565275, %v938
        %v940 = vshll.u32 683565275, %v937
        %v941 = vshrl.u32 2475754826, %v938
        %v942 = vor.u32 %v940, %v941
        %v943 = vshll.u32 2475754826, %v937
        %v944 = vshrl.u32 2131351028, %v938
        %v945 = vor.u32 %v943, %v944
        %v946 = vshll.u32 2131351028, %v937
        %v947 = vshrl.u32 2102212464, %v938
        %v948 = vor.u32 %v946, %v947
        %v949 = vshll.u32 2102212464, %v937
        %v950 = vshrl.u32 920167782, %v938
        %v951 = vor.u32 %v949, %v950
        %v952 = vshll.u32 920167782, %v937
        %v953 = vshrl.u32 1326507024, %v938
        %v954 = vor.u32 %v952, %v953
        %vm955 = vcmp.lt.s32.totalorder %v936, 1
        %vm956 = vcmp.lt.s32.totalorder %v936, 2
        %vm957 = vcmp.lt.s32.totalorder %v936, 3
        %vm958 = vcmp.lt.s32.totalorder %v936, 4
        %v959 = vsel %vm955, %v939, %v942
        %v960 = vsel %vm958, %v948, 2102212464
        %v961 = vsel %vm957, %v945, %v960
        %v962 = vsel %vm956, %v959, %v961
        %v963 = vsel %vm955, %v942, %v945
        %v964 = vsel %vm958, %v951, 920167782
        %v965 = vsel %vm957, %v948, %v964
        %v966 = vsel %vm956, %v963, %v965
        %v967 = vsel %vm955, %v945, %v948
        %v968 = vsel %vm958, %v954, 1326507024
        %v969 = vsel %vm957, %v951, %v968
        %v970 = vsel %vm956, %v967, %v969
        %v971 = vshll.u32 %v931, 8
        %v972 = vmul.u32.u64.compose %v971, %v970
        %v973 = vextract.low.u32 %v972
        %v974 = vextract.high.u32 %v972
        %v975 = vmul.u32.u64.compose %v971, %v966
        %v976 = vextract.low.u32 %v975
        %v977 = vextract.high.u32 %v975
        %v978 = vmul.u32 %v971, %v962
        %v979 = vadd.s32 %v974, %v976
        %vm980 = vc.u32 %v974, %v976
        %v981 = vadd.s32 %v977, 1
        %v982 = vsel %vm980, %v981, %v977
        %v983 = vadd.s32 %v978, %v982
        %v984 = vadd.s32 %v983, 536870912
        %v985 = vshrl.u32 %v984, 30
        %v986 = vshll.u32 %v985, 30
        %v987 = vsub.s32 %v983, %v986
        %vm988 = vcmp.lt.s32.totalorder %v987, 0
        %v989 = vsub.s32 0, %v987
        %v990 = vsel %vm988, %v989, %v987
        %v991 = vclz %v990
        %v992 = vsub.s32 %v991, 2
        %vm993 = vcmp.gt.s32.totalorder 0, %v992
        %v994 = vsel %vm993, 0, %v992
        %v995 = vsub.s32 32, %v994
        %v996 = vshll.u32 %v987, %v994
        %v997 = vshrl.u32 %v979, %v995
        %v998 = vor.u32 %v996, %v997
        %v999 = vsub.s32 4294967266, %v994
        %v1000 = vadd.s32 %v999, 127
        %v1001 = vshll.u32 %v1000, 23
        %v1002 = vor.u32 4788187, %v1001
        %v1003 = vand.u32 2147483647, %v1002
        %v1005 = vcvt.s32.f32 %v998
        %v1006 = vmul.f32 %v1005, %v1003
        %v1007 = vxor.u32 %v1006, 2147483648
        %v1008 = vsel %vm925, %v1007, %v1006
        %v1009 = vsub.s32 4, %v985
        %v1010 = vsel %vm925, %v1009, %v985
        %v1011 = vsel %vm924, %v398, %v1008
        %v1012 = vsel %vm924, 0, %v1010
        %v1013 = vcosq.f32.pop %v1011
        %v1014 = vsinq.f32.pop %v1011
        %vm1015 = vweird.f32 %v398
        %v1016 = vadd.s32 %v1012, 3
        %v1017 = vand.u32 %v1016, 3
        %vm1018 = vcmp.lt.s32.totalorder %v1017, 2
        %vm1019 = vcmp.eq.s32.totalorder %v1017, 0
        %v1020 = vxor.u32 %v1014, 2147483648
        %v1021 = vsel %vm1019, %v1013, %v1020
        %vm1022 = vcmp.eq.s32.totalorder %v1017, 2
        %v1023 = vxor.u32 %v1013, 2147483648
        %v1024 = vsel %vm1022, %v1023, %v1014
        %v1025 = vsel %vm1018, %v1021, %v1024
        %v1026 = vsel %vm1015, nan, %v1025
        %v1027 = vand.u32 2147483647, %v399
        %vm1028 = vcmp.le.f32.partialorder %v1027, 0.7853982
        %vm1029 = vcmp.lt.s32.totalorder %v399, 0
        %v1030 = vand.u32 %v399, 2139095040
        %v1031 = vshrl.u32 %v1030, 23
        %v1032 = vsub.s32 %v1031, 127
        %v1033 = vand.u32 2147483647, %v399
        %v1034 = vand.u32 %v1033, 8388607
        %v1035 = vor.u32 %v1034, 8388608
        %v1036 = vsub.s32 0, %v1035
        %v1037 = vadd.s32 %v1032, 1
        %vm1038 = vcmp.gt.s32.totalorder %v1037, 0
        %v1039 = vsel %vm1038, %v1037, 0
        %v1040 = vshrl.u32 %v1039, 5
        %v1041 = vand.u32 %v1039, 31
        %v1042 = vsub.s32 32, %v1041
        %v1043 = vshrl.u32 683565275, %v1042
        %v1044 = vshll.u32 683565275, %v1041
        %v1045 = vshrl.u32 2475754826, %v1042
        %v1046 = vor.u32 %v1044, %v1045
        %v1047 = vshll.u32 2475754826, %v1041
        %v1048 = vshrl.u32 2131351028, %v1042
        %v1049 = vor.u32 %v1047, %v1048
        %v1050 = vshll.u32 2131351028, %v1041
        %v1051 = vshrl.u32 2102212464, %v1042
        %v1052 = vor.u32 %v1050, %v1051
        %v1053 = vshll.u32 2102212464, %v1041
        %v1054 = vshrl.u32 920167782, %v1042
        %v1055 = vor.u32 %v1053, %v1054
        %v1056 = vshll.u32 920167782, %v1041
        %v1057 = vshrl.u32 1326507024, %v1042
        %v1058 = vor.u32 %v1056, %v1057
        %vm1059 = vcmp.lt.s32.totalorder %v1040, 1
        %vm1060 = vcmp.lt.s32.totalorder %v1040, 2
        %vm1061 = vcmp.lt.s32.totalorder %v1040, 3
        %vm1062 = vcmp.lt.s32.totalorder %v1040, 4
        %v1063 = vsel %vm1059, %v1043, %v1046
        %v1064 = vsel %vm1062, %v1052, 2102212464
        %v1065 = vsel %vm1061, %v1049, %v1064
        %v1066 = vsel %vm1060, %v1063, %v1065
        %v1067 = vsel %vm1059, %v1046, %v1049
        %v1068 = vsel %vm1062, %v1055, 920167782
        %v1069 = vsel %vm1061, %v1052, %v1068
        %v1070 = vsel %vm1060, %v1067, %v1069
        %v1071 = vsel %vm1059, %v1049, %v1052
        %v1072 = vsel %vm1062, %v1058, 1326507024
        %v1073 = vsel %vm1061, %v1055, %v1072
        %v1074 = vsel %vm1060, %v1071, %v1073
        %v1075 = vshll.u32 %v1035, 8
        %v1076 = vmul.u32.u64.compose %v1075, %v1074
        %v1077 = vextract.low.u32 %v1076
        %v1078 = vextract.high.u32 %v1076
        %v1079 = vmul.u32.u64.compose %v1075, %v1070
        %v1080 = vextract.low.u32 %v1079
        %v1081 = vextract.high.u32 %v1079
        %v1082 = vmul.u32 %v1075, %v1066
        %v1083 = vadd.s32 %v1078, %v1080
        %vm1084 = vc.u32 %v1078, %v1080
        %v1085 = vadd.s32 %v1081, 1
        %v1086 = vsel %vm1084, %v1085, %v1081
        %v1087 = vadd.s32 %v1082, %v1086
        %v1088 = vadd.s32 %v1087, 536870912
        %v1089 = vshrl.u32 %v1088, 30
        %v1090 = vshll.u32 %v1089, 30
        %v1091 = vsub.s32 %v1087, %v1090
        %vm1092 = vcmp.lt.s32.totalorder %v1091, 0
        %v1093 = vsub.s32 0, %v1091
        %v1094 = vsel %vm1092, %v1093, %v1091
        %v1095 = vclz %v1094
        %v1096 = vsub.s32 %v1095, 2
        %vm1097 = vcmp.gt.s32.totalorder 0, %v1096
        %v1098 = vsel %vm1097, 0, %v1096
        %v1099 = vsub.s32 32, %v1098
        %v1100 = vshll.u32 %v1091, %v1098
        %v1101 = vshrl.u32 %v1083, %v1099
        %v1102 = vor.u32 %v1100, %v1101
        %v1103 = vsub.s32 4294967266, %v1098
        %v1104 = vadd.s32 %v1103, 127
        %v1105 = vshll.u32 %v1104, 23
        %v1106 = vor.u32 4788187, %v1105
        %v1107 = vand.u32 2147483647, %v1106
        %v1109 = vcvt.s32.f32 %v1102
        %v1110 = vmul.f32 %v1109, %v1107
        %v1111 = vxor.u32 %v1110, 2147483648
        %v1112 = vsel %vm1029, %v1111, %v1110
        %v1113 = vsub.s32 4, %v1089
        %v1114 = vsel %vm1029, %v1113, %v1089
        %v1115 = vsel %vm1028, %v399, %v1112
        %v1116 = vsel %vm1028, 0, %v1114
        %v1117 = vcosq.f32.pop %v1115
        %v1118 = vsinq.f32.pop %v1115
        %vm1119 = vweird.f32 %v399
        %v1120 = vadd.s32 %v1116, 3
        %v1121 = vand.u32 %v1120, 3
        %vm1122 = vcmp.lt.s32.totalorder %v1121, 2
        %vm1123 = vcmp.eq.s32.totalorder %v1121, 0
        %v1124 = vxor.u32 %v1118, 2147483648
        %v1125 = vsel %vm1123, %v1117, %v1124
        %vm1126 = vcmp.eq.s32.totalorder %v1121, 2
        %v1127 = vxor.u32 %v1117, 2147483648
        %v1128 = vsel %vm1126, %v1127, %v1118
        %v1129 = vsel %vm1122, %v1125, %v1128
        %v1130 = vsel %vm1119, nan, %v1129
        %v1131 = vand.u32 2147483647, %v400
        %vm1132 = vcmp.le.f32.partialorder %v1131, 0.7853982
        %vm1133 = vcmp.lt.s32.totalorder %v400, 0
        %v1134 = vand.u32 %v400, 2139095040
        %v1135 = vshrl.u32 %v1134, 23
        %v1136 = vsub.s32 %v1135, 127
        %v1137 = vand.u32 2147483647, %v400
        %v1138 = vand.u32 %v1137, 8388607
        %v1139 = vor.u32 %v1138, 8388608
        %v1140 = vsub.s32 0, %v1139
        %v1141 = vadd.s32 %v1136, 1
        %vm1142 = vcmp.gt.s32.totalorder %v1141, 0
        %v1143 = vsel %vm1142, %v1141, 0
        %v1144 = vshrl.u32 %v1143, 5
        %v1145 = vand.u32 %v1143, 31
        %v1146 = vsub.s32 32, %v1145
        %v1147 = vshrl.u32 683565275, %v1146
        %v1148 = vshll.u32 683565275, %v1145
        %v1149 = vshrl.u32 2475754826, %v1146
        %v1150 = vor.u32 %v1148, %v1149
        %v1151 = vshll.u32 2475754826, %v1145
        %v1152 = vshrl.u32 2131351028, %v1146
        %v1153 = vor.u32 %v1151, %v1152
        %v1154 = vshll.u32 2131351028, %v1145
        %v1155 = vshrl.u32 2102212464, %v1146
        %v1156 = vor.u32 %v1154, %v1155
        %v1157 = vshll.u32 2102212464, %v1145
        %v1158 = vshrl.u32 920167782, %v1146
        %v1159 = vor.u32 %v1157, %v1158
        %v1160 = vshll.u32 920167782, %v1145
        %v1161 = vshrl.u32 1326507024, %v1146
        %v1162 = vor.u32 %v1160, %v1161
        %vm1163 = vcmp.lt.s32.totalorder %v1144, 1
        %vm1164 = vcmp.lt.s32.totalorder %v1144, 2
        %vm1165 = vcmp.lt.s32.totalorder %v1144, 3
        %vm1166 = vcmp.lt.s32.totalorder %v1144, 4
        %v1167 = vsel %vm1163, %v1147, %v1150
        %v1168 = vsel %vm1166, %v1156, 2102212464
        %v1169 = vsel %vm1165, %v1153, %v1168
        %v1170 = vsel %vm1164, %v1167, %v1169
        %v1171 = vsel %vm1163, %v1150, %v1153
        %v1172 = vsel %vm1166, %v1159, 920167782
        %v1173 = vsel %vm1165, %v1156, %v1172
        %v1174 = vsel %vm1164, %v1171, %v1173
        %v1175 = vsel %vm1163, %v1153, %v1156
        %v1176 = vsel %vm1166, %v1162, 1326507024
        %v1177 = vsel %vm1165, %v1159, %v1176
        %v1178 = vsel %vm1164, %v1175, %v1177
        %v1179 = vshll.u32 %v1139, 8
        %v1180 = vmul.u32.u64.compose %v1179, %v1178
        %v1181 = vextract.low.u32 %v1180
        %v1182 = vextract.high.u32 %v1180
        %v1183 = vmul.u32.u64.compose %v1179, %v1174
        %v1184 = vextract.low.u32 %v1183
        %v1185 = vextract.high.u32 %v1183
        %v1186 = vmul.u32 %v1179, %v1170
        %v1187 = vadd.s32 %v1182, %v1184
        %vm1188 = vc.u32 %v1182, %v1184
        %v1189 = vadd.s32 %v1185, 1
        %v1190 = vsel %vm1188, %v1189, %v1185
        %v1191 = vadd.s32 %v1186, %v1190
        %v1192 = vadd.s32 %v1191, 536870912
        %v1193 = vshrl.u32 %v1192, 30
        %v1194 = vshll.u32 %v1193, 30
        %v1195 = vsub.s32 %v1191, %v1194
        %vm1196 = vcmp.lt.s32.totalorder %v1195, 0
        %v1197 = vsub.s32 0, %v1195
        %v1198 = vsel %vm1196, %v1197, %v1195
        %v1199 = vclz %v1198
        %v1200 = vsub.s32 %v1199, 2
        %vm1201 = vcmp.gt.s32.totalorder 0, %v1200
        %v1202 = vsel %vm1201, 0, %v1200
        %v1203 = vsub.s32 32, %v1202
        %v1204 = vshll.u32 %v1195, %v1202
        %v1205 = vshrl.u32 %v1187, %v1203
        %v1206 = vor.u32 %v1204, %v1205
        %v1207 = vsub.s32 4294967266, %v1202
        %v1208 = vadd.s32 %v1207, 127
        %v1209 = vshll.u32 %v1208, 23
        %v1210 = vor.u32 4788187, %v1209
        %v1211 = vand.u32 2147483647, %v1210
        %v1213 = vcvt.s32.f32 %v1206
        %v1214 = vmul.f32 %v1213, %v1211
        %v1215 = vxor.u32 %v1214, 2147483648
        %v1216 = vsel %vm1133, %v1215, %v1214
        %v1217 = vsub.s32 4, %v1193
        %v1218 = vsel %vm1133, %v1217, %v1193
        %v1219 = vsel %vm1132, %v400, %v1216
        %v1220 = vsel %vm1132, 0, %v1218
        %v1221 = vcosq.f32.pop %v1219
        %v1222 = vsinq.f32.pop %v1219
        %vm1223 = vweird.f32 %v400
        %v1224 = vadd.s32 %v1220, 3
        %v1225 = vand.u32 %v1224, 3
        %vm1226 = vcmp.lt.s32.totalorder %v1225, 2
        %vm1227 = vcmp.eq.s32.totalorder %v1225, 0
        %v1228 = vxor.u32 %v1222, 2147483648
        %v1229 = vsel %vm1227, %v1221, %v1228
        %vm1230 = vcmp.eq.s32.totalorder %v1225, 2
        %v1231 = vxor.u32 %v1221, 2147483648
        %v1232 = vsel %vm1230, %v1231, %v1222
        %v1233 = vsel %vm1226, %v1229, %v1232
        %v1234 = vsel %vm1223, nan, %v1233
        %v1235 = vand.u32 2147483647, %v401
        %vm1236 = vcmp.le.f32.partialorder %v1235, 0.7853982
        %vm1237 = vcmp.lt.s32.totalorder %v401, 0
        %v1238 = vand.u32 %v401, 2139095040
        %v1239 = vshrl.u32 %v1238, 23
        %v1240 = vsub.s32 %v1239, 127
        %v1241 = vand.u32 2147483647, %v401
        %v1242 = vand.u32 %v1241, 8388607
        %v1243 = vor.u32 %v1242, 8388608
        %v1244 = vsub.s32 0, %v1243
        %v1245 = vadd.s32 %v1240, 1
        %vm1246 = vcmp.gt.s32.totalorder %v1245, 0
        %v1247 = vsel %vm1246, %v1245, 0
        %v1248 = vshrl.u32 %v1247, 5
        %v1249 = vand.u32 %v1247, 31
        %v1250 = vsub.s32 32, %v1249
        %v1251 = vshrl.u32 683565275, %v1250
        %v1252 = vshll.u32 683565275, %v1249
        %v1253 = vshrl.u32 2475754826, %v1250
        %v1254 = vor.u32 %v1252, %v1253
        %v1255 = vshll.u32 2475754826, %v1249
        %v1256 = vshrl.u32 2131351028, %v1250
        %v1257 = vor.u32 %v1255, %v1256
        %v1258 = vshll.u32 2131351028, %v1249
        %v1259 = vshrl.u32 2102212464, %v1250
        %v1260 = vor.u32 %v1258, %v1259
        %v1261 = vshll.u32 2102212464, %v1249
        %v1262 = vshrl.u32 920167782, %v1250
        %v1263 = vor.u32 %v1261, %v1262
        %v1264 = vshll.u32 920167782, %v1249
        %v1265 = vshrl.u32 1326507024, %v1250
        %v1266 = vor.u32 %v1264, %v1265
        %vm1267 = vcmp.lt.s32.totalorder %v1248, 1
        %vm1268 = vcmp.lt.s32.totalorder %v1248, 2
        %vm1269 = vcmp.lt.s32.totalorder %v1248, 3
        %vm1270 = vcmp.lt.s32.totalorder %v1248, 4
        %v1271 = vsel %vm1267, %v1251, %v1254
        %v1272 = vsel %vm1270, %v1260, 2102212464
        %v1273 = vsel %vm1269, %v1257, %v1272
        %v1274 = vsel %vm1268, %v1271, %v1273
        %v1275 = vsel %vm1267, %v1254, %v1257
        %v1276 = vsel %vm1270, %v1263, 920167782
        %v1277 = vsel %vm1269, %v1260, %v1276
        %v1278 = vsel %vm1268, %v1275, %v1277
        %v1279 = vsel %vm1267, %v1257, %v1260
        %v1280 = vsel %vm1270, %v1266, 1326507024
        %v1281 = vsel %vm1269, %v1263, %v1280
        %v1282 = vsel %vm1268, %v1279, %v1281
        %v1283 = vshll.u32 %v1243, 8
        %v1284 = vmul.u32.u64.compose %v1283, %v1282
        %v1285 = vextract.low.u32 %v1284
        %v1286 = vextract.high.u32 %v1284
        %v1287 = vmul.u32.u64.compose %v1283, %v1278
        %v1288 = vextract.low.u32 %v1287
        %v1289 = vextract.high.u32 %v1287
        %v1290 = vmul.u32 %v1283, %v1274
        %v1291 = vadd.s32 %v1286, %v1288
        %vm1292 = vc.u32 %v1286, %v1288
        %v1293 = vadd.s32 %v1289, 1
        %v1294 = vsel %vm1292, %v1293, %v1289
        %v1295 = vadd.s32 %v1290, %v1294
        %v1296 = vadd.s32 %v1295, 536870912
        %v1297 = vshrl.u32 %v1296, 30
        %v1298 = vshll.u32 %v1297, 30
        %v1299 = vsub.s32 %v1295, %v1298
        %vm1300 = vcmp.lt.s32.totalorder %v1299, 0
        %v1301 = vsub.s32 0, %v1299
        %v1302 = vsel %vm1300, %v1301, %v1299
        %v1303 = vclz %v1302
        %v1304 = vsub.s32 %v1303, 2
        %vm1305 = vcmp.gt.s32.totalorder 0, %v1304
        %v1306 = vsel %vm1305, 0, %v1304
        %v1307 = vsub.s32 32, %v1306
        %v1308 = vshll.u32 %v1299, %v1306
        %v1309 = vshrl.u32 %v1291, %v1307
        %v1310 = vor.u32 %v1308, %v1309
        %v1311 = vsub.s32 4294967266, %v1306
        %v1312 = vadd.s32 %v1311, 127
        %v1313 = vshll.u32 %v1312, 23
        %v1314 = vor.u32 4788187, %v1313
        %v1315 = vand.u32 2147483647, %v1314
        %v1317 = vcvt.s32.f32 %v1310
        %v1318 = vmul.f32 %v1317, %v1315
        %v1319 = vxor.u32 %v1318, 2147483648
        %v1320 = vsel %vm1237, %v1319, %v1318
        %v1321 = vsub.s32 4, %v1297
        %v1322 = vsel %vm1237, %v1321, %v1297
        %v1323 = vsel %vm1236, %v401, %v1320
        %v1324 = vsel %vm1236, 0, %v1322
        %v1325 = vcosq.f32.pop %v1323
        %v1326 = vsinq.f32.pop %v1323
        %vm1327 = vweird.f32 %v401
        %v1328 = vadd.s32 %v1324, 3
        %v1329 = vand.u32 %v1328, 3
        %vm1330 = vcmp.lt.s32.totalorder %v1329, 2
        %vm1331 = vcmp.eq.s32.totalorder %v1329, 0
        %v1332 = vxor.u32 %v1326, 2147483648
        %v1333 = vsel %vm1331, %v1325, %v1332
        %vm1334 = vcmp.eq.s32.totalorder %v1329, 2
        %v1335 = vxor.u32 %v1325, 2147483648
        %v1336 = vsel %vm1334, %v1335, %v1326
        %v1337 = vsel %vm1330, %v1333, %v1336
        %v1338 = vsel %vm1327, nan, %v1337
        %v1339 = vand.u32 2147483647, %v402
        %vm1340 = vcmp.le.f32.partialorder %v1339, 0.7853982
        %vm1341 = vcmp.lt.s32.totalorder %v402, 0
        %v1342 = vand.u32 %v402, 2139095040
        %v1343 = vshrl.u32 %v1342, 23
        %v1344 = vsub.s32 %v1343, 127
        %v1345 = vand.u32 2147483647, %v402
        %v1346 = vand.u32 %v1345, 8388607
        %v1347 = vor.u32 %v1346, 8388608
        %v1348 = vsub.s32 0, %v1347
        %v1349 = vadd.s32 %v1344, 1
        %vm1350 = vcmp.gt.s32.totalorder %v1349, 0
        %v1351 = vsel %vm1350, %v1349, 0
        %v1352 = vshrl.u32 %v1351, 5
        %v1353 = vand.u32 %v1351, 31
        %v1354 = vsub.s32 32, %v1353
        %v1355 = vshrl.u32 683565275, %v1354
        %v1356 = vshll.u32 683565275, %v1353
        %v1357 = vshrl.u32 2475754826, %v1354
        %v1358 = vor.u32 %v1356, %v1357
        %v1359 = vshll.u32 2475754826, %v1353
        %v1360 = vshrl.u32 2131351028, %v1354
        %v1361 = vor.u32 %v1359, %v1360
        %v1362 = vshll.u32 2131351028, %v1353
        %v1363 = vshrl.u32 2102212464, %v1354
        %v1364 = vor.u32 %v1362, %v1363
        %v1365 = vshll.u32 2102212464, %v1353
        %v1366 = vshrl.u32 920167782, %v1354
        %v1367 = vor.u32 %v1365, %v1366
        %v1368 = vshll.u32 920167782, %v1353
        %v1369 = vshrl.u32 1326507024, %v1354
        %v1370 = vor.u32 %v1368, %v1369
        %vm1371 = vcmp.lt.s32.totalorder %v1352, 1
        %vm1372 = vcmp.lt.s32.totalorder %v1352, 2
        %vm1373 = vcmp.lt.s32.totalorder %v1352, 3
        %vm1374 = vcmp.lt.s32.totalorder %v1352, 4
        %v1375 = vsel %vm1371, %v1355, %v1358
        %v1376 = vsel %vm1374, %v1364, 2102212464
        %v1377 = vsel %vm1373, %v1361, %v1376
        %v1378 = vsel %vm1372, %v1375, %v1377
        %v1379 = vsel %vm1371, %v1358, %v1361
        %v1380 = vsel %vm1374, %v1367, 920167782
        %v1381 = vsel %vm1373, %v1364, %v1380
        %v1382 = vsel %vm1372, %v1379, %v1381
        %v1383 = vsel %vm1371, %v1361, %v1364
        %v1384 = vsel %vm1374, %v1370, 1326507024
        %v1385 = vsel %vm1373, %v1367, %v1384
        %v1386 = vsel %vm1372, %v1383, %v1385
        %v1387 = vshll.u32 %v1347, 8
        %v1388 = vmul.u32.u64.compose %v1387, %v1386
        %v1389 = vextract.low.u32 %v1388
        %v1390 = vextract.high.u32 %v1388
        %v1391 = vmul.u32.u64.compose %v1387, %v1382
        %v1392 = vextract.low.u32 %v1391
        %v1393 = vextract.high.u32 %v1391
        %v1394 = vmul.u32 %v1387, %v1378
        %v1395 = vadd.s32 %v1390, %v1392
        %vm1396 = vc.u32 %v1390, %v1392
        %v1397 = vadd.s32 %v1393, 1
        %v1398 = vsel %vm1396, %v1397, %v1393
        %v1399 = vadd.s32 %v1394, %v1398
        %v1400 = vadd.s32 %v1399, 536870912
        %v1401 = vshrl.u32 %v1400, 30
        %v1402 = vshll.u32 %v1401, 30
        %v1403 = vsub.s32 %v1399, %v1402
        %vm1404 = vcmp.lt.s32.totalorder %v1403, 0
        %v1405 = vsub.s32 0, %v1403
        %v1406 = vsel %vm1404, %v1405, %v1403
        %v1407 = vclz %v1406
        %v1408 = vsub.s32 %v1407, 2
        %vm1409 = vcmp.gt.s32.totalorder 0, %v1408
        %v1410 = vsel %vm1409, 0, %v1408
        %v1411 = vsub.s32 32, %v1410
        %v1412 = vshll.u32 %v1403, %v1410
        %v1413 = vshrl.u32 %v1395, %v1411
        %v1414 = vor.u32 %v1412, %v1413
        %v1415 = vsub.s32 4294967266, %v1410
        %v1416 = vadd.s32 %v1415, 127
        %v1417 = vshll.u32 %v1416, 23
        %v1418 = vor.u32 4788187, %v1417
        %v1419 = vand.u32 2147483647, %v1418
        %v1421 = vcvt.s32.f32 %v1414
        %v1422 = vmul.f32 %v1421, %v1419
        %v1423 = vxor.u32 %v1422, 2147483648
        %v1424 = vsel %vm1341, %v1423, %v1422
        %v1425 = vsub.s32 4, %v1401
        %v1426 = vsel %vm1341, %v1425, %v1401
        %v1427 = vsel %vm1340, %v402, %v1424
        %v1428 = vsel %vm1340, 0, %v1426
        %v1429 = vcosq.f32.pop %v1427
        %v1430 = vsinq.f32.pop %v1427
        %vm1431 = vweird.f32 %v402
        %v1432 = vadd.s32 %v1428, 3
        %v1433 = vand.u32 %v1432, 3
        %vm1434 = vcmp.lt.s32.totalorder %v1433, 2
        %vm1435 = vcmp.eq.s32.totalorder %v1433, 0
        %v1436 = vxor.u32 %v1430, 2147483648
        %v1437 = vsel %vm1435, %v1429, %v1436
        %vm1438 = vcmp.eq.s32.totalorder %v1433, 2
        %v1439 = vxor.u32 %v1429, 2147483648
        %v1440 = vsel %vm1438, %v1439, %v1430
        %v1441 = vsel %vm1434, %v1437, %v1440
        %v1442 = vsel %vm1431, nan, %v1441
        %1443 = vst [vmem:[%s176] sm:$0xff] %v506
        %1444 = vst [vmem:[%s176 + $0x8] sm:$0xff] %v610
        %1445 = vst [vmem:[%s176 + $0x10] sm:$0xff] %v714
        %1446 = vst [vmem:[%s176 + $0x18] sm:$0xff] %v818
        %1447 = vst [vmem:[%s176 + $0x20] sm:$0xff] %v922
        %1448 = vst [vmem:[%s176 + $0x28] sm:$0xff] %v1026
        %1449 = vst [vmem:[%s176 + $0x30] sm:$0xff] %v1130
        %1450 = vst [vmem:[%s176 + $0x38] sm:$0xff] %v1234
        %1451 = vst [vmem:[%s176 + $0x40] sm:$0xff] %v1338
        %1452 = vst [vmem:[%s176 + $0x48] sm:$0xff] %v1442
        %s1453 = sand.u32 %s93, 1
        %s1454 = scalar_lea.sflag [#allocation3], %s1453
        %s1455 = sand.u32 %s93, 1
        %s1456 = smul.addr %s1455, 80
        %s1457 = scalar_lea.vmem [#allocation2], %s1456
        // Predicated region
        $region33: #{tpu_custom_call.1} parent=31 // pred_check
          %p1458 = pneg %p103
        $region34: #{tpu_custom_call.1} parent=31 // pred_check_branch
          %1460 = sbr.rel (%p1458) target = $region36
        $region35: #{tpu_custom_call.1} parent=31 // pred_region
          %s1461 = smul.u32 10, %s17
          %s1462 = ssub.s32 38, %s1461
          %p1463 = scmp.lt.s32.totalorder %s1462, 10
          %s1464 = scalar_select %p1463, %s1462, 10
          %s1465 = smul.u32 128, %s1464
          %s1467 = ssub.s32 1280, %s1465
          %1468 = vsyncadd %s1454, %s1467
          %p1469 = scmp.ne.s32.totalorder 0, %s1465
          %s1470 = smul.addr %s1461, 128
          %s1471 = scalar_lea.hbm %s3, %s1470
          %s1472 = smul.u32 8, %s1464
          %s1473 = sshll.u32 %s1457, 4
          %s1474 = int_to_ptr.vmem [resolvable:$true] %s1473
          %s1475 = sshll.u32 %s1472, 4
          %1479 = dma.vmem_to_hbm [thread:$0]  (%p1469), %s1474, %s1475, %s1471, %s1454, 128, 128, 8
        $region36: #{tpu_custom_call.1} parent=31 // pred_fallthru
          _
      $region32: #{tpu_custom_call.1} parent=5 // pred_fallthru
        _
      %p1480 = scmp.le.s32.totalorder 2, %s12
      // Predicated region
      $region37: #{tpu_custom_call.1} parent=5 // pred_check
        %p1481 = pneg %p1480
      $region38: #{tpu_custom_call.1} parent=5 // pred_check_branch
        %1483 = sbr.rel (%p1481) target = $region40
      $region39: #{tpu_custom_call.1} parent=5 // pred_region
        %s1484 = ssub.s32 %s12, 2
        // Predicated region
        $region41: #{tpu_custom_call.1} parent=39 // pred_check
          %p1485 = pneg %p109
        $region42: #{tpu_custom_call.1} parent=39 // pred_check_branch
          %1487 = sbr.rel (%p1485) target = $region44
        $region43: #{tpu_custom_call.1} parent=39 // pred_region
          %s1488 = sand.u32 %s94, 1
          %s1489 = scalar_lea.sflag [#allocation3], %s1488
          %s1490 = sand.u32 %s94, 1
          %s1491 = smul.addr %s1490, 80
          %s1492 = scalar_lea.vmem [#allocation2], %s1491
          %1493 = dma.done %s1489, 1280
        $region44: #{tpu_custom_call.1} parent=39 // pred_fallthru
          _
      $region40: #{tpu_custom_call.1} parent=5 // pred_fallthru
        _
    $region6: #{tpu_custom_call.1} parent=1 // loop_footer
      %s16 = sadd.s32 1, %s12
    $region7: #{tpu_custom_call.1} parent=1 // loop_footer_branch
      %11 = sbr.rel target = $region3
    $region8: #{tpu_custom_call.1} parent=1 // loop_exit
      _
    %1494 = vsyncpa [#allocation3], 1
    %s1495 = scalar_lea.sflag [#allocation3], 1
    %1496 = vsyncpa %s1495, 1

// kernel: tpu_custom_call.1
$region0: #{tpu_custom_call.1}
  #allocation0 [shape = 'u32[]', space=smem, size = 0x4, offset = 0x4, fixed_abs, tag = 'smem constant byte address 0x4 - core index']
  #allocation1 [shape = 'u32[144,128]{1,0:T(1,128)}', space=vmem, size = 0x12000, scoped, tag = 'internal scratch']
  %s0 = inlined_call_operand.vmem [shape: f32[300,32], index: 0, kind: input, shape index: {}]
  %s1 = inlined_call_operand.vmem [shape: f32[32,128], index: 1, kind: input, shape index: {}]
  %s2 = inlined_call_operand.vmem [shape: f32[1,128], index: 2, kind: input, shape index: {}]
  %s3 = inlined_call_operand.hbm [shape: f32[300,128], index: 3, kind: output, shape index: {}]
  %s4 = sld [smem:[#allocation0]]
  $region45: #{tpu_custom_call.1} parent=0
    _
  %s6 = ssub.s32 1, %s4
  %s7 = scalar_select 0, %s6, %s4
  $region1: #{tpu_custom_call.1} parent=0
    #allocation2 [shape = 'u8[81920]{0}', space=vmem, size = 0x14000, scoped, tag = 'output window, operand 0']
    #allocation3 [shape = 's32[2]{0}', space=sflag, size = 0x8, scoped, tag = 'scoped memory for tpu_custom_call.1']
    %8 = vsyncpa [#allocation3], 0
    %s9 = scalar_lea.sflag [#allocation3], 1
    %10 = vsyncpa %s9, 0
    loop: start=0, step=1, limit=6
    $region2: #{tpu_custom_call.1} parent=1 // loop_pre_header
      _
    $region3: #{tpu_custom_call.1} parent=1 // loop_header
      %s12 = sphi 0, %s16
      %p13 = scmp.ge.s32.totalorder %s12, 6
      %s22 = sphi 0, %s24
      %s25 = sphi 0, %s22
      %s26 = sphi 0, %s25
      %s42 = sphi 0, %s26
      %s46 = sphi 0, %s46
      %s48 = sphi 0, %s46
      %s49 = sphi 0, %s48
      %s63 = sphi 0, %s49
      %s67 = sphi 0, %s67
      %s69 = sphi 0, %s67
      %s70 = sphi 0, %s69
      %s84 = sphi 0, %s70
      %s90 = sphi 0, %s92
      %s93 = sphi 0, %s90
      %s94 = sphi 0, %s93
      %s110 = sphi 0, %s94
    $region4: #{tpu_custom_call.1} parent=1 // loop_header_branch
      %15 = sbr.rel (%p13) target = $region8
    $region5: #{tpu_custom_call.1} parent=1 // loop_body
      %s17 = ssub.s32 %s12, 1
      %s18 = ssub.s32 %s12, 2
      %s19 = sadd.s32 %s12, 1
      %s20 = ssub.s32 %s12, %s19
      %p21 = scmp.eq.s32.totalorder %s20, 0
      %s23 = sadd.s32 %s22, 1
      %s24 = scalar_select %p21, %s22, %s23
      %p27 = pneg %p21
      %p28 = scmp.eq.s32.totalorder %s12, 3
      %p29 = por %p27, %p28
      %p30 = scmp.ne.s32.totalorder %s22, %s25
      %p31 = scmp.eq.s32.totalorder %s12, 0
      %p32 = por %p30, %p31
      %p33 = scmp.ne.s32.totalorder %s22, %s25
      %p34 = scmp.eq.s32.totalorder %s17, 3
      %p35 = por %p33, %p34
      %p36 = scmp.ne.s32.totalorder %s25, %s26
      %p37 = scmp.eq.s32.totalorder %s17, 0
      %p38 = por %p36, %p37
      %p39 = scmp.ne.s32.totalorder %s25, %s26
      %p40 = scmp.eq.s32.totalorder %s18, 3
      %p41 = por %p39, %p40
      %p43 = scmp.ne.s32.totalorder %s26, %s42
      %p44 = scmp.eq.s32.totalorder %s18, 0
      %p45 = por %p43, %p44
      %s47 = sadd.s32 %s46, 1
      %p50 = scmp.eq.s32.totalorder %s12, 3
      %p51 = scmp.ne.s32.totalorder %s46, %s48
      %p52 = scmp.eq.s32.totalorder %s12, 0
      %p53 = por %p51, %p52
      %p54 = scmp.ne.s32.totalorder %s46, %s48
      %p55 = scmp.eq.s32.totalorder %s17, 3
      %p56 = por %p54, %p55
      %p57 = scmp.ne.s32.totalorder %s48, %s49
      %p58 = scmp.eq.s32.totalorder %s17, 0
      %p59 = por %p57, %p58
      %p60 = scmp.ne.s32.totalorder %s48, %s49
      %p61 = scmp.eq.s32.totalorder %s18, 3
      %p62 = por %p60, %p61
      %p64 = scmp.ne.s32.totalorder %s49, %s63
      %p65 = scmp.eq.s32.totalorder %s18, 0
      %p66 = por %p64, %p65
      %s68 = sadd.s32 %s67, 1
      %p71 = scmp.eq.s32.totalorder %s12, 3
      %p72 = scmp.ne.s32.totalorder %s67, %s69
      %p73 = scmp.eq.s32.totalorder %s12, 0
      %p74 = por %p72, %p73
      %p75 = scmp.ne.s32.totalorder %s67, %s69
      %p76 = scmp.eq.s32.totalorder %s17, 3
      %p77 = por %p75, %p76
      %p78 = scmp.ne.s32.totalorder %s69, %s70
      %p79 = scmp.eq.s32.totalorder %s17, 0
      %p80 = por %p78, %p79
      %p81 = scmp.ne.s32.totalorder %s69, %s70
      %p82 = scmp.eq.s32.totalorder %s18, 3
      %p83 = por %p81, %p82
      %p85 = scmp.ne.s32.totalorder %s70, %s84
      %p86 = scmp.eq.s32.totalorder %s18, 0
      %p87 = por %p85, %p86
      %s88 = ssub.s32 %s12, %s19
      %p89 = scmp.eq.s32.totalorder %s88, 0
      %s91 = sadd.s32 %s90, 1
      %s92 = scalar_select %p89, %s90, %s91
      %p95 = pneg %p89
      %p96 = scmp.eq.s32.totalorder %s12, 3
      %p97 = por %p95, %p96
      %p98 = scmp.ne.s32.totalorder %s90, %s93
      %p99 = scmp.eq.s32.totalorder %s12, 0
      %p100 = por %p98, %p99
      %p101 = scmp.ne.s32.totalorder %s90, %s93
      %p102 = scmp.eq.s32.totalorder %s17, 3
      %p103 = por %p101, %p102
      %p104 = scmp.ne.s32.totalorder %s93, %s94
      %p105 = scmp.eq.s32.totalorder %s17, 0
      %p106 = por %p104, %p105
      %p107 = scmp.ne.s32.totalorder %s93, %s94
      %p108 = scmp.eq.s32.totalorder %s18, 3
      %p109 = por %p107, %p108
      %p111 = scmp.ne.s32.totalorder %s94, %s110
      %p112 = scmp.eq.s32.totalorder %s18, 0
      %p113 = por %p111, %p112
      %p114 = scmp.le.s32.totalorder 1, %s12
      %p115 = scmp.lt.s32.totalorder %s12, 5
      %p116 = pnand %p114, %p115
      %p117 = pneg %p116
      // Predicated region
      $region9: #{tpu_custom_call.1} parent=5 // pred_check
        _
      $region10: #{tpu_custom_call.1} parent=5 // pred_check_branch
        %119 = sbr.rel (%p116) target = $region12
      $region11: #{tpu_custom_call.1} parent=5 // pred_region
        %s120 = ssub.s32 %s12, 1
        // Predicated region
        $region13: #{tpu_custom_call.1} parent=11 // pred_check
          %p121 = pneg %p59
        $region14: #{tpu_custom_call.1} parent=11 // pred_check_branch
          %123 = sbr.rel (%p121) target = $region16
        $region15: #{tpu_custom_call.1} parent=11 // pred_region
          _
        $region16: #{tpu_custom_call.1} parent=11 // pred_fallthru
          _
        // Predicated region
        $region17: #{tpu_custom_call.1} parent=11 // pred_check
          %p124 = pneg %p80
        $region18: #{tpu_custom_call.1} parent=11 // pred_check_branch
          %126 = sbr.rel (%p124) target = $region20
        $region19: #{tpu_custom_call.1} parent=11 // pred_region
          _
        $region20: #{tpu_custom_call.1} parent=11 // pred_fallthru
          _
      $region12: #{tpu_custom_call.1} parent=5 // pred_fallthru
        _
      %p127 = scmp.lt.s32.totalorder %s12, 4
      // Predicated region
      $region21: #{tpu_custom_call.1} parent=5 // pred_check
        %p128 = pneg %p127
      $region22: #{tpu_custom_call.1} parent=5 // pred_check_branch
        %130 = sbr.rel (%p128) target = $region24
      $region23: #{tpu_custom_call.1} parent=5 // pred_region
        // Predicated region
        $region25: #{tpu_custom_call.1} parent=23 // pred_check
          %p131 = pneg %p32
        $region26: #{tpu_custom_call.1} parent=23 // pred_check_branch
          %133 = sbr.rel (%p131) target = $region28
        $region27: #{tpu_custom_call.1} parent=23 // pred_region
          %s134 = smul.u32 10, %s12
          %s135 = ssub.s32 38, %s134
          %p136 = scmp.lt.s32.totalorder %s135, 10
          %s137 = scalar_select %p136, %s135, 10
          %s138 = smul.u32 128, %s137
          %p139 = scmp.lt.s32.totalorder %s134, 37
          %s140 = scalar_select %p139, %s134, 37
          %s141 = smul.addr %s140, 8
          %s142 = scalar_lea.vmem %s0, %s141
          %s143 = smul.u32 10, %s12
          %s144 = ssub.s32 38, %s143
          %p145 = scmp.lt.s32.totalorder %s144, 10
          %s146 = scalar_select %p145, %s144, 10
          %s147 = smul.u32 128, %s146
        $region28: #{tpu_custom_call.1} parent=23 // pred_fallthru
          _
      $region24: #{tpu_custom_call.1} parent=5 // pred_fallthru
        _
      %p148 = scmp.le.s32.totalorder 1, %s12
      %p149 = scmp.lt.s32.totalorder %s12, 5
      %p150 = pnand %p148, %p149
      %p151 = pneg %p150
      // Predicated region
      $region29: #{tpu_custom_call.1} parent=5 // pred_check
        _
      $region30: #{tpu_custom_call.1} parent=5 // pred_check_branch
        %153 = sbr.rel (%p150) target = $region32
      $region31: #{tpu_custom_call.1} parent=5 // pred_region
        %s154 = ssub.s32 %s12, 1
        %s155 = smul.u32 10, %s17
        %s156 = ssub.s32 38, %s155
        %p157 = scmp.lt.s32.totalorder %s156, 10
        %s158 = scalar_select %p157, %s156, 10
        %s159 = smul.u32 128, %s158
        %p160 = scmp.lt.s32.totalorder %s155, 37
        %s161 = scalar_select %p160, %s155, 37
        %s162 = smul.addr %s161, 8
        %s163 = scalar_lea.vmem %s0, %s162
        %p164 = pneg %p38
        %p165 = pneg %p35
        %p166 = pneg %p59
        %p167 = pneg %p56
        %p168 = pneg %p80
        %p169 = pneg %p77
        %p170 = pneg %p106
        %p171 = pneg %p103
        %s172 = sand.u32 %s93, 1
        %s173 = scalar_lea.sflag [#allocation3], %s172
        %s174 = sand.u32 %s93, 1
        %s175 = smul.addr %s174, 80
        %s176 = scalar_lea.vmem [#allocation2], %s175
        %s177 = smul.u32 10, %s17
        %s178 = ssub.s32 38, %s177
        %p179 = scmp.lt.s32.totalorder %s178, 10
        %s180 = scalar_select %p179, %s178, 10
        %s181 = smul.u32 128, %s180
        %p182 = scmp.lt.s32.totalorder %s177, 37
        %s183 = scalar_select %p182, %s177, 37
        %s184 = smul.addr %s183, 8
        %s185 = scalar_lea.vmem %s0, %s184
        %s186 = smul.u32 10, %s17
        %s187 = ssub.s32 38, %s186
        %p188 = scmp.lt.s32.totalorder %s187, 10
        %s189 = scalar_select %p188, %s187, 10
        %s190 = smul.u32 128, %s189
        %s191 = smul.u32 10, %s17
        %s192 = ssub.s32 38, %s191
        %p193 = scmp.lt.s32.totalorder %s192, 10
        %s194 = scalar_select %p193, %s192, 10
        %s195 = smul.u32 128, %s194
        %v196 = vld [vmem:[%s185] sm:$0xff]
        %v197 = vld [vmem:[%s185 + $0x8] sm:$0xff]
        %v198 = vld [vmem:[%s185 + $0x10] sm:$0xff]
        %v199 = vld [vmem:[%s185 + $0x18] sm:$0xff]
        %v200 = vld [vmem:[%s185 + $0x20] sm:$0xff]
        %v201 = vld [vmem:[%s185 + $0x28] sm:$0xff]
        %v202 = vld [vmem:[%s185 + $0x30] sm:$0xff]
        %v203 = vld [vmem:[%s185 + $0x38] sm:$0xff]
        %v204 = vld [vmem:[%s185 + $0x40] sm:$0xff]
        %v205 = vld [vmem:[%s185 + $0x48] sm:$0xff]
        %v206 = vld [vmem:[%s1] sm:$0xff]
        %v207 = vld [vmem:[%s1 + $0x8] sm:$0xff]
        %v208 = vld [vmem:[%s1 + $0x10] sm:$0xff]
        %v209 = vld [vmem:[%s1 + $0x18] sm:$0xff]
        %v210 = vld [vmem:[%s2] sm:$0x1]
        %v212 = vlaneseq
        %v213 = vshrl.u32 %v212, 7
        %v214 = vsub.s32 0, %v213
        %v215 = vrot.slane %v210, %v214
        %vm217 = vcmask 261120
        %v219 = vsel %vm217, %v196, 0
        %v222 = vsel %vm217, %v197, 0
        %v225 = vsel %vm217, %v198, 0
        %v228 = vsel %vm217, %v199, 0
        %v231 = vsel %vm217, %v200, 0
        %v234 = vsel %vm217, %v201, 0
        %v237 = vsel %vm217, %v202, 0
        %v240 = vsel %vm217, %v203, 0
        %v243 = vsel %vm217, %v204, 0
        %v246 = vsel %vm217, %v205, 0
        %248 = vmatprep.subr.mxu0 0.0
        %249 = vmatpush1.msra.mxu0 0.0
        %250 = vmatprep.subr.mxu0 0.0
        %251 = vmatpush1.msra.mxu0 0.0
        %252 = vmatprep.subr.mxu0 0.0
        %253 = vmatpush1.msra.mxu0 0.0
        %254 = vmatprep.subr.mxu0 0.0
        %255 = vmatpush1.msra.mxu0 0.0
        %256 = vmatprep.subr.mxu0 0.0
        %257 = vmatpush1.msra.mxu0 0.0
        %258 = vmatprep.subr.mxu0 0.0
        %259 = vmatpush1.msra.mxu0 0.0
        %260 = vmatprep.subr.mxu0 0.0
        %261 = vmatpush1.msra.mxu0 0.0
        %262 = vmatprep.subr.mxu0 0.0
        %263 = vmatpush1.msra.mxu0 0.0
        %264 = vmatprep.subr.mxu0 0.0
        %265 = vmatpush1.msra.mxu0 0.0
        %266 = vmatprep.subr.mxu0 0.0
        %267 = vmatpush1.msra.mxu0 0.0
        %268 = vmatprep.subr.mxu0 0.0
        %269 = vmatpush1.msra.mxu0 0.0
        %270 = vmatprep.subr.mxu0 0.0
        %271 = vmatpush1.msra.mxu0 0.0
        %272 = vmatprep.subr.mxu0 0.0
        %273 = vmatpush1.msra.mxu0 %v209
        %274 = vmatprep.subr.mxu0 0.0
        %275 = vmatpush1.msra.mxu0 %v208
        %276 = vmatprep.subr.mxu0 0.0
        %277 = vmatpush1.msra.mxu0 %v207
        %278 = vmatprep.subr.mxu0 0.0
        %279 = vmatpush1.msra.mxu0 %v206
        %280 = vmatprep.subr.mxu0 0.0
        %281 = vmatpush2.msra.mxu0 0.0
        %282 = vmatprep.subr.mxu0 0.0
        %283 = vmatpush2.msra.mxu0 0.0
        %284 = vmatprep.subr.mxu0 0.0
        %285 = vmatpush2.msra.mxu0 0.0
        %286 = vmatprep.subr.mxu0 0.0
        %287 = vmatpush2.msra.mxu0 0.0
        %288 = vmatprep.subr.mxu0 0.0
        %289 = vmatpush2.msra.mxu0 0.0
        %290 = vmatprep.subr.mxu0 0.0
        %291 = vmatpush2.msra.mxu0 0.0
        %292 = vmatprep.subr.mxu0 0.0
        %293 = vmatpush2.msra.mxu0 0.0
        %294 = vmatprep.subr.mxu0 0.0
        %295 = vmatpush2.msra.mxu0 0.0
        %296 = vmatprep.subr.mxu0 0.0
        %297 = vmatpush2.msra.mxu0 0.0
        %298 = vmatprep.subr.mxu0 0.0
        %299 = vmatpush2.msra.mxu0 0.0
        %300 = vmatprep.subr.mxu0 0.0
        %301 = vmatpush2.msra.mxu0 0.0
        %302 = vmatprep.subr.mxu0 0.0
        %303 = vmatpush2.msra.mxu0 0.0
        %304 = vmatprep.subr.mxu0 0.0
        %305 = vmatpush2.msra.mxu0 0.0
        %306 = vmatprep.subr.mxu0 0.0
        %307 = vmatpush2.msra.mxu0 0.0
        %308 = vmatprep.subr.mxu0 0.0
        %309 = vmatpush2.msra.mxu0 0.0
        %310 = vmatprep.subr.mxu0 0.0
        %311 = vmatpush2.msra.mxu0 0.0
        %312 = vmatprep.mubr.f32.mxu0 0.0
        %313 = vmatmul.mubr.f32.gmra.mxu0 %v219
        %v314 = vpop.f32.mrf.mxu0
        %v315 = vadd.f32 %v215, %v314
        %v316 = vpop.f32.mrf.mxu0
        %317 = vmatprep.mubr.f32.mxu0 0.0
        %318 = vmatmul.mubr.f32.gmra.mxu0 %v222
        %v319 = vpop.f32.mrf.mxu0
        %v320 = vadd.f32 %v215, %v319
        %v321 = vpop.f32.mrf.mxu0
        %322 = vmatprep.mubr.f32.mxu0 0.0
        %323 = vmatmul.mubr.f32.gmra.mxu0 %v225
        %v324 = vpop.f32.mrf.mxu0
        %v325 = vadd.f32 %v215, %v324
        %v326 = vpop.f32.mrf.mxu0
        %327 = vmatprep.mubr.f32.mxu0 0.0
        %328 = vmatmul.mubr.f32.gmra.mxu0 %v228
        %v329 = vpop.f32.mrf.mxu0
        %v330 = vadd.f32 %v215, %v329
        %v331 = vpop.f32.mrf.mxu0
        %332 = vmatprep.mubr.f32.mxu0 0.0
        %333 = vmatmul.mubr.f32.gmra.mxu0 %v231
        %v334 = vpop.f32.mrf.mxu0
        %v335 = vadd.f32 %v215, %v334
        %v336 = vpop.f32.mrf.mxu0
        %337 = vmatprep.mubr.f32.mxu0 0.0
        %338 = vmatmul.mubr.f32.gmra.mxu0 %v234
        %v339 = vpop.f32.mrf.mxu0
        %v340 = vadd.f32 %v215, %v339
        %v341 = vpop.f32.mrf.mxu0
        %342 = vmatprep.mubr.f32.mxu0 0.0
        %343 = vmatmul.mubr.f32.gmra.mxu0 %v237
        %v344 = vpop.f32.mrf.mxu0
        %v345 = vadd.f32 %v215, %v344
        %v346 = vpop.f32.mrf.mxu0
        %347 = vmatprep.mubr.f32.mxu0 0.0
        %348 = vmatmul.mubr.f32.gmra.mxu0 %v240
        %v349 = vpop.f32.mrf.mxu0
        %v350 = vadd.f32 %v215, %v349
        %v351 = vpop.f32.mrf.mxu0
        %352 = vmatprep.mubr.f32.mxu0 0.0
        %353 = vmatmul.mubr.f32.gmra.mxu0 %v243
        %v354 = vpop.f32.mrf.mxu0
        %v355 = vadd.f32 %v215, %v354
        %v356 = vpop.f32.mrf.mxu0
        %357 = vmatprep.mubr.f32.mxu0 0.0
        %358 = vmatmul.mubr.f32.gmra.mxu0 %v246
        %v359 = vpop.f32.mrf.mxu0
        %v360 = vadd.f32 %v215, %v359
        %v361 = vpop.f32.mrf.mxu0
        %362 = vdwg.mxu0
        %v363 = vand.u32 2147483647, %v315
        %v364 = vand.u32 2147483647, %v320
        %v365 = vand.u32 2147483647, %v325
        %v366 = vand.u32 2147483647, %v330
        %v367 = vand.u32 2147483647, %v335
        %v368 = vand.u32 2147483647, %v340
        %v369 = vand.u32 2147483647, %v345
        %v370 = vand.u32 2147483647, %v350
        %v371 = vand.u32 2147483647, %v355
        %v372 = vand.u32 2147483647, %v360
        %v373 = vadd.f32 %v363, 1.0
        %v374 = vadd.f32 %v364, 1.0
        %v375 = vadd.f32 %v365, 1.0
        %v376 = vadd.f32 %v366, 1.0
        %v377 = vadd.f32 %v367, 1.0
        %v378 = vadd.f32 %v368, 1.0
        %v379 = vadd.f32 %v369, 1.0
        %v380 = vadd.f32 %v370, 1.0
        %v381 = vadd.f32 %v371, 1.0
        %v382 = vadd.f32 %v372, 1.0
        %v383 = vmul.f32 %v373, 30.0
        %v384 = vmul.f32 %v374, 30.0
        %v385 = vmul.f32 %v375, 30.0
        %v386 = vmul.f32 %v376, 30.0
        %v387 = vmul.f32 %v377, 30.0
        %v388 = vmul.f32 %v378, 30.0
        %v389 = vmul.f32 %v379, 30.0
        %v390 = vmul.f32 %v380, 30.0
        %v391 = vmul.f32 %v381, 30.0
        %v392 = vmul.f32 %v382, 30.0
        %v393 = vmul.f32 %v383, %v315
        %v394 = vmul.f32 %v384, %v320
        %v395 = vmul.f32 %v385, %v325
        %v396 = vmul.f32 %v386, %v330
        %v397 = vmul.f32 %v387, %v335
        %v398 = vmul.f32 %v388, %v340
        %v399 = vmul.f32 %v389, %v345
        %v400 = vmul.f32 %v390, %v350
        %v401 = vmul.f32 %v391, %v355
        %v402 = vmul.f32 %v392, %v360
        %v403 = vand.u32 2147483647, %v393
        %vm404 = vcmp.le.f32.partialorder %v403, 0.7853982
        %vm405 = vcmp.lt.s32.totalorder %v393, 0
        %v406 = vand.u32 %v393, 2139095040
        %v407 = vshrl.u32 %v406, 23
        %v408 = vsub.s32 %v407, 127
        %v409 = vand.u32 2147483647, %v393
        %v410 = vand.u32 %v409, 8388607
        %v411 = vor.u32 %v410, 8388608
        %v412 = vsub.s32 0, %v411
        %v413 = vadd.s32 %v408, 1
        %vm414 = vcmp.gt.s32.totalorder %v413, 0
        %v415 = vsel %vm414, %v413, 0
        %v416 = vshrl.u32 %v415, 5
        %v417 = vand.u32 %v415, 31
        %v418 = vsub.s32 32, %v417
        %v419 = vshrl.u32 683565275, %v418
        %v420 = vshll.u32 683565275, %v417
        %v421 = vshrl.u32 2475754826, %v418
        %v422 = vor.u32 %v420, %v421
        %v423 = vshll.u32 2475754826, %v417
        %v424 = vshrl.u32 2131351028, %v418
        %v425 = vor.u32 %v423, %v424
        %v426 = vshll.u32 2131351028, %v417
        %v427 = vshrl.u32 2102212464, %v418
        %v428 = vor.u32 %v426, %v427
        %v429 = vshll.u32 2102212464, %v417
        %v430 = vshrl.u32 920167782, %v418
        %v431 = vor.u32 %v429, %v430
        %v432 = vshll.u32 920167782, %v417
        %v433 = vshrl.u32 1326507024, %v418
        %v434 = vor.u32 %v432, %v433
        %vm435 = vcmp.lt.s32.totalorder %v416, 1
        %vm436 = vcmp.lt.s32.totalorder %v416, 2
        %vm437 = vcmp.lt.s32.totalorder %v416, 3
        %vm438 = vcmp.lt.s32.totalorder %v416, 4
        %v439 = vsel %vm435, %v419, %v422
        %v440 = vsel %vm438, %v428, 2102212464
        %v441 = vsel %vm437, %v425, %v440
        %v442 = vsel %vm436, %v439, %v441
        %v443 = vsel %vm435, %v422, %v425
        %v444 = vsel %vm438, %v431, 920167782
        %v445 = vsel %vm437, %v428, %v444
        %v446 = vsel %vm436, %v443, %v445
        %v447 = vsel %vm435, %v425, %v428
        %v448 = vsel %vm438, %v434, 1326507024
        %v449 = vsel %vm437, %v431, %v448
        %v450 = vsel %vm436, %v447, %v449
        %v451 = vshll.u32 %v411, 8
        %v452 = vmul.u32.u64.compose %v451, %v450
        %v453 = vextract.low.u32 %v452
        %v454 = vextract.high.u32 %v452
        %v455 = vmul.u32.u64.compose %v451, %v446
        %v456 = vextract.low.u32 %v455
        %v457 = vextract.high.u32 %v455
        %v458 = vmul.u32 %v451, %v442
        %v459 = vadd.s32 %v454, %v456
        %vm460 = vc.u32 %v454, %v456
        %v461 = vadd.s32 %v457, 1
        %v462 = vsel %vm460, %v461, %v457
        %v463 = vadd.s32 %v458, %v462
        %v464 = vadd.s32 %v463, 536870912
        %v465 = vshrl.u32 %v464, 30
        %v466 = vshll.u32 %v465, 30
        %v467 = vsub.s32 %v463, %v466
        %vm468 = vcmp.lt.s32.totalorder %v467, 0
        %v469 = vsub.s32 0, %v467
        %v470 = vsel %vm468, %v469, %v467
        %v471 = vclz %v470
        %v472 = vsub.s32 %v471, 2
        %vm473 = vcmp.gt.s32.totalorder 0, %v472
        %v474 = vsel %vm473, 0, %v472
        %v475 = vsub.s32 32, %v474
        %v476 = vshll.u32 %v467, %v474
        %v477 = vshrl.u32 %v459, %v475
        %v478 = vor.u32 %v476, %v477
        %v479 = vsub.s32 4294967266, %v474
        %v480 = vadd.s32 %v479, 127
        %v481 = vshll.u32 %v480, 23
        %v482 = vor.u32 4788187, %v481
        %v483 = vand.u32 2147483647, %v482
        %v485 = vcvt.s32.f32 %v478
        %v486 = vmul.f32 %v485, %v483
        %v487 = vxor.u32 %v486, 2147483648
        %v488 = vsel %vm405, %v487, %v486
        %v489 = vsub.s32 4, %v465
        %v490 = vsel %vm405, %v489, %v465
        %v491 = vsel %vm404, %v393, %v488
        %v492 = vsel %vm404, 0, %v490
        %v493 = vcosq.f32.pop %v491
        %v494 = vsinq.f32.pop %v491
        %vm495 = vweird.f32 %v393
        %v496 = vadd.s32 %v492, 3
        %v497 = vand.u32 %v496, 3
        %vm498 = vcmp.lt.s32.totalorder %v497, 2
        %vm499 = vcmp.eq.s32.totalorder %v497, 0
        %v500 = vxor.u32 %v494, 2147483648
        %v501 = vsel %vm499, %v493, %v500
        %vm502 = vcmp.eq.s32.totalorder %v497, 2
        %v503 = vxor.u32 %v493, 2147483648
        %v504 = vsel %vm502, %v503, %v494
        %v505 = vsel %vm498, %v501, %v504
        %v506 = vsel %vm495, nan, %v505
        %v507 = vand.u32 2147483647, %v394
        %vm508 = vcmp.le.f32.partialorder %v507, 0.7853982
        %vm509 = vcmp.lt.s32.totalorder %v394, 0
        %v510 = vand.u32 %v394, 2139095040
        %v511 = vshrl.u32 %v510, 23
        %v512 = vsub.s32 %v511, 127
        %v513 = vand.u32 2147483647, %v394
        %v514 = vand.u32 %v513, 8388607
        %v515 = vor.u32 %v514, 8388608
        %v516 = vsub.s32 0, %v515
        %v517 = vadd.s32 %v512, 1
        %vm518 = vcmp.gt.s32.totalorder %v517, 0
        %v519 = vsel %vm518, %v517, 0
        %v520 = vshrl.u32 %v519, 5
        %v521 = vand.u32 %v519, 31
        %v522 = vsub.s32 32, %v521
        %v523 = vshrl.u32 683565275, %v522
        %v524 = vshll.u32 683565275, %v521
        %v525 = vshrl.u32 2475754826, %v522
        %v526 = vor.u32 %v524, %v525
        %v527 = vshll.u32 2475754826, %v521
        %v528 = vshrl.u32 2131351028, %v522
        %v529 = vor.u32 %v527, %v528
        %v530 = vshll.u32 2131351028, %v521
        %v531 = vshrl.u32 2102212464, %v522
        %v532 = vor.u32 %v530, %v531
        %v533 = vshll.u32 2102212464, %v521
        %v534 = vshrl.u32 920167782, %v522
        %v535 = vor.u32 %v533, %v534
        %v536 = vshll.u32 920167782, %v521
        %v537 = vshrl.u32 1326507024, %v522
        %v538 = vor.u32 %v536, %v537
        %vm539 = vcmp.lt.s32.totalorder %v520, 1
        %vm540 = vcmp.lt.s32.totalorder %v520, 2
        %vm541 = vcmp.lt.s32.totalorder %v520, 3
        %vm542 = vcmp.lt.s32.totalorder %v520, 4
        %v543 = vsel %vm539, %v523, %v526
        %v544 = vsel %vm542, %v532, 2102212464
        %v545 = vsel %vm541, %v529, %v544
        %v546 = vsel %vm540, %v543, %v545
        %v547 = vsel %vm539, %v526, %v529
        %v548 = vsel %vm542, %v535, 920167782
        %v549 = vsel %vm541, %v532, %v548
        %v550 = vsel %vm540, %v547, %v549
        %v551 = vsel %vm539, %v529, %v532
        %v552 = vsel %vm542, %v538, 1326507024
        %v553 = vsel %vm541, %v535, %v552
        %v554 = vsel %vm540, %v551, %v553
        %v555 = vshll.u32 %v515, 8
        %v556 = vmul.u32.u64.compose %v555, %v554
        %v557 = vextract.low.u32 %v556
        %v558 = vextract.high.u32 %v556
        %v559 = vmul.u32.u64.compose %v555, %v550
        %v560 = vextract.low.u32 %v559
        %v561 = vextract.high.u32 %v559
        %v562 = vmul.u32 %v555, %v546
        %v563 = vadd.s32 %v558, %v560
        %vm564 = vc.u32 %v558, %v560
        %v565 = vadd.s32 %v561, 1
        %v566 = vsel %vm564, %v565, %v561
        %v567 = vadd.s32 %v562, %v566
        %v568 = vadd.s32 %v567, 536870912
        %v569 = vshrl.u32 %v568, 30
        %v570 = vshll.u32 %v569, 30
        %v571 = vsub.s32 %v567, %v570
        %vm572 = vcmp.lt.s32.totalorder %v571, 0
        %v573 = vsub.s32 0, %v571
        %v574 = vsel %vm572, %v573, %v571
        %v575 = vclz %v574
        %v576 = vsub.s32 %v575, 2
        %vm577 = vcmp.gt.s32.totalorder 0, %v576
        %v578 = vsel %vm577, 0, %v576
        %v579 = vsub.s32 32, %v578
        %v580 = vshll.u32 %v571, %v578
        %v581 = vshrl.u32 %v563, %v579
        %v582 = vor.u32 %v580, %v581
        %v583 = vsub.s32 4294967266, %v578
        %v584 = vadd.s32 %v583, 127
        %v585 = vshll.u32 %v584, 23
        %v586 = vor.u32 4788187, %v585
        %v587 = vand.u32 2147483647, %v586
        %v589 = vcvt.s32.f32 %v582
        %v590 = vmul.f32 %v589, %v587
        %v591 = vxor.u32 %v590, 2147483648
        %v592 = vsel %vm509, %v591, %v590
        %v593 = vsub.s32 4, %v569
        %v594 = vsel %vm509, %v593, %v569
        %v595 = vsel %vm508, %v394, %v592
        %v596 = vsel %vm508, 0, %v594
        %v597 = vcosq.f32.pop %v595
        %v598 = vsinq.f32.pop %v595
        %vm599 = vweird.f32 %v394
        %v600 = vadd.s32 %v596, 3
        %v601 = vand.u32 %v600, 3
        %vm602 = vcmp.lt.s32.totalorder %v601, 2
        %vm603 = vcmp.eq.s32.totalorder %v601, 0
        %v604 = vxor.u32 %v598, 2147483648
        %v605 = vsel %vm603, %v597, %v604
        %vm606 = vcmp.eq.s32.totalorder %v601, 2
        %v607 = vxor.u32 %v597, 2147483648
        %v608 = vsel %vm606, %v607, %v598
        %v609 = vsel %vm602, %v605, %v608
        %v610 = vsel %vm599, nan, %v609
        %v611 = vand.u32 2147483647, %v395
        %vm612 = vcmp.le.f32.partialorder %v611, 0.7853982
        %vm613 = vcmp.lt.s32.totalorder %v395, 0
        %v614 = vand.u32 %v395, 2139095040
        %v615 = vshrl.u32 %v614, 23
        %v616 = vsub.s32 %v615, 127
        %v617 = vand.u32 2147483647, %v395
        %v618 = vand.u32 %v617, 8388607
        %v619 = vor.u32 %v618, 8388608
        %v620 = vsub.s32 0, %v619
        %v621 = vadd.s32 %v616, 1
        %vm622 = vcmp.gt.s32.totalorder %v621, 0
        %v623 = vsel %vm622, %v621, 0
        %v624 = vshrl.u32 %v623, 5
        %v625 = vand.u32 %v623, 31
        %v626 = vsub.s32 32, %v625
        %v627 = vshrl.u32 683565275, %v626
        %v628 = vshll.u32 683565275, %v625
        %v629 = vshrl.u32 2475754826, %v626
        %v630 = vor.u32 %v628, %v629
        %v631 = vshll.u32 2475754826, %v625
        %v632 = vshrl.u32 2131351028, %v626
        %v633 = vor.u32 %v631, %v632
        %v634 = vshll.u32 2131351028, %v625
        %v635 = vshrl.u32 2102212464, %v626
        %v636 = vor.u32 %v634, %v635
        %v637 = vshll.u32 2102212464, %v625
        %v638 = vshrl.u32 920167782, %v626
        %v639 = vor.u32 %v637, %v638
        %v640 = vshll.u32 920167782, %v625
        %v641 = vshrl.u32 1326507024, %v626
        %v642 = vor.u32 %v640, %v641
        %vm643 = vcmp.lt.s32.totalorder %v624, 1
        %vm644 = vcmp.lt.s32.totalorder %v624, 2
        %vm645 = vcmp.lt.s32.totalorder %v624, 3
        %vm646 = vcmp.lt.s32.totalorder %v624, 4
        %v647 = vsel %vm643, %v627, %v630
        %v648 = vsel %vm646, %v636, 2102212464
        %v649 = vsel %vm645, %v633, %v648
        %v650 = vsel %vm644, %v647, %v649
        %v651 = vsel %vm643, %v630, %v633
        %v652 = vsel %vm646, %v639, 920167782
        %v653 = vsel %vm645, %v636, %v652
        %v654 = vsel %vm644, %v651, %v653
        %v655 = vsel %vm643, %v633, %v636
        %v656 = vsel %vm646, %v642, 1326507024
        %v657 = vsel %vm645, %v639, %v656
        %v658 = vsel %vm644, %v655, %v657
        %v659 = vshll.u32 %v619, 8
        %v660 = vmul.u32.u64.compose %v659, %v658
        %v661 = vextract.low.u32 %v660
        %v662 = vextract.high.u32 %v660
        %v663 = vmul.u32.u64.compose %v659, %v654
        %v664 = vextract.low.u32 %v663
        %v665 = vextract.high.u32 %v663
        %v666 = vmul.u32 %v659, %v650
        %v667 = vadd.s32 %v662, %v664
        %vm668 = vc.u32 %v662, %v664
        %v669 = vadd.s32 %v665, 1
        %v670 = vsel %vm668, %v669, %v665
        %v671 = vadd.s32 %v666, %v670
        %v672 = vadd.s32 %v671, 536870912
        %v673 = vshrl.u32 %v672, 30
        %v674 = vshll.u32 %v673, 30
        %v675 = vsub.s32 %v671, %v674
        %vm676 = vcmp.lt.s32.totalorder %v675, 0
        %v677 = vsub.s32 0, %v675
        %v678 = vsel %vm676, %v677, %v675
        %v679 = vclz %v678
        %v680 = vsub.s32 %v679, 2
        %vm681 = vcmp.gt.s32.totalorder 0, %v680
        %v682 = vsel %vm681, 0, %v680
        %v683 = vsub.s32 32, %v682
        %v684 = vshll.u32 %v675, %v682
        %v685 = vshrl.u32 %v667, %v683
        %v686 = vor.u32 %v684, %v685
        %v687 = vsub.s32 4294967266, %v682
        %v688 = vadd.s32 %v687, 127
        %v689 = vshll.u32 %v688, 23
        %v690 = vor.u32 4788187, %v689
        %v691 = vand.u32 2147483647, %v690
        %v693 = vcvt.s32.f32 %v686
        %v694 = vmul.f32 %v693, %v691
        %v695 = vxor.u32 %v694, 2147483648
        %v696 = vsel %vm613, %v695, %v694
        %v697 = vsub.s32 4, %v673
        %v698 = vsel %vm613, %v697, %v673
        %v699 = vsel %vm612, %v395, %v696
        %v700 = vsel %vm612, 0, %v698
        %v701 = vcosq.f32.pop %v699
        %v702 = vsinq.f32.pop %v699
        %vm703 = vweird.f32 %v395
        %v704 = vadd.s32 %v700, 3
        %v705 = vand.u32 %v704, 3
        %vm706 = vcmp.lt.s32.totalorder %v705, 2
        %vm707 = vcmp.eq.s32.totalorder %v705, 0
        %v708 = vxor.u32 %v702, 2147483648
        %v709 = vsel %vm707, %v701, %v708
        %vm710 = vcmp.eq.s32.totalorder %v705, 2
        %v711 = vxor.u32 %v701, 2147483648
        %v712 = vsel %vm710, %v711, %v702
        %v713 = vsel %vm706, %v709, %v712
        %v714 = vsel %vm703, nan, %v713
        %v715 = vand.u32 2147483647, %v396
        %vm716 = vcmp.le.f32.partialorder %v715, 0.7853982
        %vm717 = vcmp.lt.s32.totalorder %v396, 0
        %v718 = vand.u32 %v396, 2139095040
        %v719 = vshrl.u32 %v718, 23
        %v720 = vsub.s32 %v719, 127
        %v721 = vand.u32 2147483647, %v396
        %v722 = vand.u32 %v721, 8388607
        %v723 = vor.u32 %v722, 8388608
        %v724 = vsub.s32 0, %v723
        %v725 = vadd.s32 %v720, 1
        %vm726 = vcmp.gt.s32.totalorder %v725, 0
        %v727 = vsel %vm726, %v725, 0
        %v728 = vshrl.u32 %v727, 5
        %v729 = vand.u32 %v727, 31
        %v730 = vsub.s32 32, %v729
        %v731 = vshrl.u32 683565275, %v730
        %v732 = vshll.u32 683565275, %v729
        %v733 = vshrl.u32 2475754826, %v730
        %v734 = vor.u32 %v732, %v733
        %v735 = vshll.u32 2475754826, %v729
        %v736 = vshrl.u32 2131351028, %v730
        %v737 = vor.u32 %v735, %v736
        %v738 = vshll.u32 2131351028, %v729
        %v739 = vshrl.u32 2102212464, %v730
        %v740 = vor.u32 %v738, %v739
        %v741 = vshll.u32 2102212464, %v729
        %v742 = vshrl.u32 920167782, %v730
        %v743 = vor.u32 %v741, %v742
        %v744 = vshll.u32 920167782, %v729
        %v745 = vshrl.u32 1326507024, %v730
        %v746 = vor.u32 %v744, %v745
        %vm747 = vcmp.lt.s32.totalorder %v728, 1
        %vm748 = vcmp.lt.s32.totalorder %v728, 2
        %vm749 = vcmp.lt.s32.totalorder %v728, 3
        %vm750 = vcmp.lt.s32.totalorder %v728, 4
        %v751 = vsel %vm747, %v731, %v734
        %v752 = vsel %vm750, %v740, 2102212464
        %v753 = vsel %vm749, %v737, %v752
        %v754 = vsel %vm748, %v751, %v753
        %v755 = vsel %vm747, %v734, %v737
        %v756 = vsel %vm750, %v743, 920167782
        %v757 = vsel %vm749, %v740, %v756
        %v758 = vsel %vm748, %v755, %v757
        %v759 = vsel %vm747, %v737, %v740
        %v760 = vsel %vm750, %v746, 1326507024
        %v761 = vsel %vm749, %v743, %v760
        %v762 = vsel %vm748, %v759, %v761
        %v763 = vshll.u32 %v723, 8
        %v764 = vmul.u32.u64.compose %v763, %v762
        %v765 = vextract.low.u32 %v764
        %v766 = vextract.high.u32 %v764
        %v767 = vmul.u32.u64.compose %v763, %v758
        %v768 = vextract.low.u32 %v767
        %v769 = vextract.high.u32 %v767
        %v770 = vmul.u32 %v763, %v754
        %v771 = vadd.s32 %v766, %v768
        %vm772 = vc.u32 %v766, %v768
        %v773 = vadd.s32 %v769, 1
        %v774 = vsel %vm772, %v773, %v769
        %v775 = vadd.s32 %v770, %v774
        %v776 = vadd.s32 %v775, 536870912
        %v777 = vshrl.u32 %v776, 30
        %v778 = vshll.u32 %v777, 30
        %v779 = vsub.s32 %v775, %v778
        %vm780 = vcmp.lt.s32.totalorder %v779, 0
        %v781 = vsub.s32 0, %v779
        %v782 = vsel %vm780, %v781, %v779
        %v783 = vclz %v782
        %v784 = vsub.s32 %v783, 2
        %vm785 = vcmp.gt.s32.totalorder 0, %v784
        %v786 = vsel %vm785, 0, %v784
        %v787 = vsub.s32 32, %v786
        %v788 = vshll.u32 %v779, %v786
        %v789 = vshrl.u32 %v771, %v787
        %v790 = vor.u32 %v788, %v789
        %v791 = vsub.s32 4294967266, %v786
        %v792 = vadd.s32 %v791, 127
        %v793 = vshll.u32 %v792, 23
        %v794 = vor.u32 4788187, %v793
        %v795 = vand.u32 2147483647, %v794
        %v797 = vcvt.s32.f32 %v790
        %v798 = vmul.f32 %v797, %v795
        %v799 = vxor.u32 %v798, 2147483648
        %v800 = vsel %vm717, %v799, %v798
        %v801 = vsub.s32 4, %v777
        %v802 = vsel %vm717, %v801, %v777
        %v803 = vsel %vm716, %v396, %v800
        %v804 = vsel %vm716, 0, %v802
        %v805 = vcosq.f32.pop %v803
        %v806 = vsinq.f32.pop %v803
        %vm807 = vweird.f32 %v396
        %v808 = vadd.s32 %v804, 3
        %v809 = vand.u32 %v808, 3
        %vm810 = vcmp.lt.s32.totalorder %v809, 2
        %vm811 = vcmp.eq.s32.totalorder %v809, 0
        %v812 = vxor.u32 %v806, 2147483648
        %v813 = vsel %vm811, %v805, %v812
        %vm814 = vcmp.eq.s32.totalorder %v809, 2
        %v815 = vxor.u32 %v805, 2147483648
        %v816 = vsel %vm814, %v815, %v806
        %v817 = vsel %vm810, %v813, %v816
        %v818 = vsel %vm807, nan, %v817
        %v819 = vand.u32 2147483647, %v397
        %vm820 = vcmp.le.f32.partialorder %v819, 0.7853982
        %vm821 = vcmp.lt.s32.totalorder %v397, 0
        %v822 = vand.u32 %v397, 2139095040
        %v823 = vshrl.u32 %v822, 23
        %v824 = vsub.s32 %v823, 127
        %v825 = vand.u32 2147483647, %v397
        %v826 = vand.u32 %v825, 8388607
        %v827 = vor.u32 %v826, 8388608
        %v828 = vsub.s32 0, %v827
        %v829 = vadd.s32 %v824, 1
        %vm830 = vcmp.gt.s32.totalorder %v829, 0
        %v831 = vsel %vm830, %v829, 0
        %v832 = vshrl.u32 %v831, 5
        %v833 = vand.u32 %v831, 31
        %v834 = vsub.s32 32, %v833
        %v835 = vshrl.u32 683565275, %v834
        %v836 = vshll.u32 683565275, %v833
        %v837 = vshrl.u32 2475754826, %v834
        %v838 = vor.u32 %v836, %v837
        %v839 = vshll.u32 2475754826, %v833
        %v840 = vshrl.u32 2131351028, %v834
        %v841 = vor.u32 %v839, %v840
        %v842 = vshll.u32 2131351028, %v833
        %v843 = vshrl.u32 2102212464, %v834
        %v844 = vor.u32 %v842, %v843
        %v845 = vshll.u32 2102212464, %v833
        %v846 = vshrl.u32 920167782, %v834
        %v847 = vor.u32 %v845, %v846
        %v848 = vshll.u32 920167782, %v833
        %v849 = vshrl.u32 1326507024, %v834
        %v850 = vor.u32 %v848, %v849
        %vm851 = vcmp.lt.s32.totalorder %v832, 1
        %vm852 = vcmp.lt.s32.totalorder %v832, 2
        %vm853 = vcmp.lt.s32.totalorder %v832, 3
        %vm854 = vcmp.lt.s32.totalorder %v832, 4
        %v855 = vsel %vm851, %v835, %v838
        %v856 = vsel %vm854, %v844, 2102212464
        %v857 = vsel %vm853, %v841, %v856
        %v858 = vsel %vm852, %v855, %v857
        %v859 = vsel %vm851, %v838, %v841
        %v860 = vsel %vm854, %v847, 920167782
        %v861 = vsel %vm853, %v844, %v860
        %v862 = vsel %vm852, %v859, %v861
        %v863 = vsel %vm851, %v841, %v844
        %v864 = vsel %vm854, %v850, 1326507024
        %v865 = vsel %vm853, %v847, %v864
        %v866 = vsel %vm852, %v863, %v865
        %v867 = vshll.u32 %v827, 8
        %v868 = vmul.u32.u64.compose %v867, %v866
        %v869 = vextract.low.u32 %v868
        %v870 = vextract.high.u32 %v868
        %v871 = vmul.u32.u64.compose %v867, %v862
        %v872 = vextract.low.u32 %v871
        %v873 = vextract.high.u32 %v871
        %v874 = vmul.u32 %v867, %v858
        %v875 = vadd.s32 %v870, %v872
        %vm876 = vc.u32 %v870, %v872
        %v877 = vadd.s32 %v873, 1
        %v878 = vsel %vm876, %v877, %v873
        %v879 = vadd.s32 %v874, %v878
        %v880 = vadd.s32 %v879, 536870912
        %v881 = vshrl.u32 %v880, 30
        %v882 = vshll.u32 %v881, 30
        %v883 = vsub.s32 %v879, %v882
        %vm884 = vcmp.lt.s32.totalorder %v883, 0
        %v885 = vsub.s32 0, %v883
        %v886 = vsel %vm884, %v885, %v883
        %v887 = vclz %v886
        %v888 = vsub.s32 %v887, 2
        %vm889 = vcmp.gt.s32.totalorder 0, %v888
        %v890 = vsel %vm889, 0, %v888
        %v891 = vsub.s32 32, %v890
        %v892 = vshll.u32 %v883, %v890
        %v893 = vshrl.u32 %v875, %v891
        %v894 = vor.u32 %v892, %v893
        %v895 = vsub.s32 4294967266, %v890
        %v896 = vadd.s32 %v895, 127
        %v897 = vshll.u32 %v896, 23
        %v898 = vor.u32 4788187, %v897
        %v899 = vand.u32 2147483647, %v898
        %v901 = vcvt.s32.f32 %v894
        %v902 = vmul.f32 %v901, %v899
        %v903 = vxor.u32 %v902, 2147483648
        %v904 = vsel %vm821, %v903, %v902
        %v905 = vsub.s32 4, %v881
        %v906 = vsel %vm821, %v905, %v881
        %v907 = vsel %vm820, %v397, %v904
        %v908 = vsel %vm820, 0, %v906
        %v909 = vcosq.f32.pop %v907
        %v910 = vsinq.f32.pop %v907
        %vm911 = vweird.f32 %v397
        %v912 = vadd.s32 %v908, 3
        %v913 = vand.u32 %v912, 3
        %vm914 = vcmp.lt.s32.totalorder %v913, 2
        %vm915 = vcmp.eq.s32.totalorder %v913, 0
        %v916 = vxor.u32 %v910, 2147483648
        %v917 = vsel %vm915, %v909, %v916
        %vm918 = vcmp.eq.s32.totalorder %v913, 2
        %v919 = vxor.u32 %v909, 2147483648
        %v920 = vsel %vm918, %v919, %v910
        %v921 = vsel %vm914, %v917, %v920
        %v922 = vsel %vm911, nan, %v921
        %v923 = vand.u32 2147483647, %v398
        %vm924 = vcmp.le.f32.partialorder %v923, 0.7853982
        %vm925 = vcmp.lt.s32.totalorder %v398, 0
        %v926 = vand.u32 %v398, 2139095040
        %v927 = vshrl.u32 %v926, 23
        %v928 = vsub.s32 %v927, 127
        %v929 = vand.u32 2147483647, %v398
        %v930 = vand.u32 %v929, 8388607
        %v931 = vor.u32 %v930, 8388608
        %v932 = vsub.s32 0, %v931
        %v933 = vadd.s32 %v928, 1
        %vm934 = vcmp.gt.s32.totalorder %v933, 0
        %v935 = vsel %vm934, %v933, 0
        %v936 = vshrl.u32 %v935, 5
        %v937 = vand.u32 %v935, 31
        %v938 = vsub.s32 32, %v937
        %v939 = vshrl.u32 683565275, %v938
        %v940 = vshll.u32 683565275, %v937
        %v941 = vshrl.u32 2475754826, %v938
        %v942 = vor.u32 %v940, %v941
        %v943 = vshll.u32 2475754826, %v937
        %v944 = vshrl.u32 2131351028, %v938
        %v945 = vor.u32 %v943, %v944
        %v946 = vshll.u32 2131351028, %v937
        %v947 = vshrl.u32 2102212464, %v938
        %v948 = vor.u32 %v946, %v947
        %v949 = vshll.u32 2102212464, %v937
        %v950 = vshrl.u32 920167782, %v938
        %v951 = vor.u32 %v949, %v950
        %v952 = vshll.u32 920167782, %v937
        %v953 = vshrl.u32 1326507024, %v938
        %v954 = vor.u32 %v952, %v953
        %vm955 = vcmp.lt.s32.totalorder %v936, 1
        %vm956 = vcmp.lt.s32.totalorder %v936, 2
        %vm957 = vcmp.lt.s32.totalorder %v936, 3
        %vm958 = vcmp.lt.s32.totalorder %v936, 4
        %v959 = vsel %vm955, %v939, %v942
        %v960 = vsel %vm958, %v948, 2102212464
        %v961 = vsel %vm957, %v945, %v960
        %v962 = vsel %vm956, %v959, %v961
        %v963 = vsel %vm955, %v942, %v945
        %v964 = vsel %vm958, %v951, 920167782
        %v965 = vsel %vm957, %v948, %v964
        %v966 = vsel %vm956, %v963, %v965
        %v967 = vsel %vm955, %v945, %v948
        %v968 = vsel %vm958, %v954, 1326507024
        %v969 = vsel %vm957, %v951, %v968
        %v970 = vsel %vm956, %v967, %v969
        %v971 = vshll.u32 %v931, 8
        %v972 = vmul.u32.u64.compose %v971, %v970
        %v973 = vextract.low.u32 %v972
        %v974 = vextract.high.u32 %v972
        %v975 = vmul.u32.u64.compose %v971, %v966
        %v976 = vextract.low.u32 %v975
        %v977 = vextract.high.u32 %v975
        %v978 = vmul.u32 %v971, %v962
        %v979 = vadd.s32 %v974, %v976
        %vm980 = vc.u32 %v974, %v976
        %v981 = vadd.s32 %v977, 1
        %v982 = vsel %vm980, %v981, %v977
        %v983 = vadd.s32 %v978, %v982
        %v984 = vadd.s32 %v983, 536870912
        %v985 = vshrl.u32 %v984, 30
        %v986 = vshll.u32 %v985, 30
        %v987 = vsub.s32 %v983, %v986
        %vm988 = vcmp.lt.s32.totalorder %v987, 0
        %v989 = vsub.s32 0, %v987
        %v990 = vsel %vm988, %v989, %v987
        %v991 = vclz %v990
        %v992 = vsub.s32 %v991, 2
        %vm993 = vcmp.gt.s32.totalorder 0, %v992
        %v994 = vsel %vm993, 0, %v992
        %v995 = vsub.s32 32, %v994
        %v996 = vshll.u32 %v987, %v994
        %v997 = vshrl.u32 %v979, %v995
        %v998 = vor.u32 %v996, %v997
        %v999 = vsub.s32 4294967266, %v994
        %v1000 = vadd.s32 %v999, 127
        %v1001 = vshll.u32 %v1000, 23
        %v1002 = vor.u32 4788187, %v1001
        %v1003 = vand.u32 2147483647, %v1002
        %v1005 = vcvt.s32.f32 %v998
        %v1006 = vmul.f32 %v1005, %v1003
        %v1007 = vxor.u32 %v1006, 2147483648
        %v1008 = vsel %vm925, %v1007, %v1006
        %v1009 = vsub.s32 4, %v985
        %v1010 = vsel %vm925, %v1009, %v985
        %v1011 = vsel %vm924, %v398, %v1008
        %v1012 = vsel %vm924, 0, %v1010
        %v1013 = vcosq.f32.pop %v1011
        %v1014 = vsinq.f32.pop %v1011
        %vm1015 = vweird.f32 %v398
        %v1016 = vadd.s32 %v1012, 3
        %v1017 = vand.u32 %v1016, 3
        %vm1018 = vcmp.lt.s32.totalorder %v1017, 2
        %vm1019 = vcmp.eq.s32.totalorder %v1017, 0
        %v1020 = vxor.u32 %v1014, 2147483648
        %v1021 = vsel %vm1019, %v1013, %v1020
        %vm1022 = vcmp.eq.s32.totalorder %v1017, 2
        %v1023 = vxor.u32 %v1013, 2147483648
        %v1024 = vsel %vm1022, %v1023, %v1014
        %v1025 = vsel %vm1018, %v1021, %v1024
        %v1026 = vsel %vm1015, nan, %v1025
        %v1027 = vand.u32 2147483647, %v399
        %vm1028 = vcmp.le.f32.partialorder %v1027, 0.7853982
        %vm1029 = vcmp.lt.s32.totalorder %v399, 0
        %v1030 = vand.u32 %v399, 2139095040
        %v1031 = vshrl.u32 %v1030, 23
        %v1032 = vsub.s32 %v1031, 127
        %v1033 = vand.u32 2147483647, %v399
        %v1034 = vand.u32 %v1033, 8388607
        %v1035 = vor.u32 %v1034, 8388608
        %v1036 = vsub.s32 0, %v1035
        %v1037 = vadd.s32 %v1032, 1
        %vm1038 = vcmp.gt.s32.totalorder %v1037, 0
        %v1039 = vsel %vm1038, %v1037, 0
        %v1040 = vshrl.u32 %v1039, 5
        %v1041 = vand.u32 %v1039, 31
        %v1042 = vsub.s32 32, %v1041
        %v1043 = vshrl.u32 683565275, %v1042
        %v1044 = vshll.u32 683565275, %v1041
        %v1045 = vshrl.u32 2475754826, %v1042
        %v1046 = vor.u32 %v1044, %v1045
        %v1047 = vshll.u32 2475754826, %v1041
        %v1048 = vshrl.u32 2131351028, %v1042
        %v1049 = vor.u32 %v1047, %v1048
        %v1050 = vshll.u32 2131351028, %v1041
        %v1051 = vshrl.u32 2102212464, %v1042
        %v1052 = vor.u32 %v1050, %v1051
        %v1053 = vshll.u32 2102212464, %v1041
        %v1054 = vshrl.u32 920167782, %v1042
        %v1055 = vor.u32 %v1053, %v1054
        %v1056 = vshll.u32 920167782, %v1041
        %v1057 = vshrl.u32 1326507024, %v1042
        %v1058 = vor.u32 %v1056, %v1057
        %vm1059 = vcmp.lt.s32.totalorder %v1040, 1
        %vm1060 = vcmp.lt.s32.totalorder %v1040, 2
        %vm1061 = vcmp.lt.s32.totalorder %v1040, 3
        %vm1062 = vcmp.lt.s32.totalorder %v1040, 4
        %v1063 = vsel %vm1059, %v1043, %v1046
        %v1064 = vsel %vm1062, %v1052, 2102212464
        %v1065 = vsel %vm1061, %v1049, %v1064
        %v1066 = vsel %vm1060, %v1063, %v1065
        %v1067 = vsel %vm1059, %v1046, %v1049
        %v1068 = vsel %vm1062, %v1055, 920167782
        %v1069 = vsel %vm1061, %v1052, %v1068
        %v1070 = vsel %vm1060, %v1067, %v1069
        %v1071 = vsel %vm1059, %v1049, %v1052
        %v1072 = vsel %vm1062, %v1058, 1326507024
        %v1073 = vsel %vm1061, %v1055, %v1072
        %v1074 = vsel %vm1060, %v1071, %v1073
        %v1075 = vshll.u32 %v1035, 8
        %v1076 = vmul.u32.u64.compose %v1075, %v1074
        %v1077 = vextract.low.u32 %v1076
        %v1078 = vextract.high.u32 %v1076
        %v1079 = vmul.u32.u64.compose %v1075, %v1070
        %v1080 = vextract.low.u32 %v1079
        %v1081 = vextract.high.u32 %v1079
        %v1082 = vmul.u32 %v1075, %v1066
        %v1083 = vadd.s32 %v1078, %v1080
        %vm1084 = vc.u32 %v1078, %v1080
        %v1085 = vadd.s32 %v1081, 1
        %v1086 = vsel %vm1084, %v1085, %v1081
        %v1087 = vadd.s32 %v1082, %v1086
        %v1088 = vadd.s32 %v1087, 536870912
        %v1089 = vshrl.u32 %v1088, 30
        %v1090 = vshll.u32 %v1089, 30
        %v1091 = vsub.s32 %v1087, %v1090
        %vm1092 = vcmp.lt.s32.totalorder %v1091, 0
        %v1093 = vsub.s32 0, %v1091
        %v1094 = vsel %vm1092, %v1093, %v1091
        %v1095 = vclz %v1094
        %v1096 = vsub.s32 %v1095, 2
        %vm1097 = vcmp.gt.s32.totalorder 0, %v1096
        %v1098 = vsel %vm1097, 0, %v1096
        %v1099 = vsub.s32 32, %v1098
        %v1100 = vshll.u32 %v1091, %v1098
        %v1101 = vshrl.u32 %v1083, %v1099
        %v1102 = vor.u32 %v1100, %v1101
        %v1103 = vsub.s32 4294967266, %v1098
        %v1104 = vadd.s32 %v1103, 127
        %v1105 = vshll.u32 %v1104, 23
        %v1106 = vor.u32 4788187, %v1105
        %v1107 = vand.u32 2147483647, %v1106
        %v1109 = vcvt.s32.f32 %v1102
        %v1110 = vmul.f32 %v1109, %v1107
        %v1111 = vxor.u32 %v1110, 2147483648
        %v1112 = vsel %vm1029, %v1111, %v1110
        %v1113 = vsub.s32 4, %v1089
        %v1114 = vsel %vm1029, %v1113, %v1089
        %v1115 = vsel %vm1028, %v399, %v1112
        %v1116 = vsel %vm1028, 0, %v1114
        %v1117 = vcosq.f32.pop %v1115
        %v1118 = vsinq.f32.pop %v1115
        %vm1119 = vweird.f32 %v399
        %v1120 = vadd.s32 %v1116, 3
        %v1121 = vand.u32 %v1120, 3
        %vm1122 = vcmp.lt.s32.totalorder %v1121, 2
        %vm1123 = vcmp.eq.s32.totalorder %v1121, 0
        %v1124 = vxor.u32 %v1118, 2147483648
        %v1125 = vsel %vm1123, %v1117, %v1124
        %vm1126 = vcmp.eq.s32.totalorder %v1121, 2
        %v1127 = vxor.u32 %v1117, 2147483648
        %v1128 = vsel %vm1126, %v1127, %v1118
        %v1129 = vsel %vm1122, %v1125, %v1128
        %v1130 = vsel %vm1119, nan, %v1129
        %v1131 = vand.u32 2147483647, %v400
        %vm1132 = vcmp.le.f32.partialorder %v1131, 0.7853982
        %vm1133 = vcmp.lt.s32.totalorder %v400, 0
        %v1134 = vand.u32 %v400, 2139095040
        %v1135 = vshrl.u32 %v1134, 23
        %v1136 = vsub.s32 %v1135, 127
        %v1137 = vand.u32 2147483647, %v400
        %v1138 = vand.u32 %v1137, 8388607
        %v1139 = vor.u32 %v1138, 8388608
        %v1140 = vsub.s32 0, %v1139
        %v1141 = vadd.s32 %v1136, 1
        %vm1142 = vcmp.gt.s32.totalorder %v1141, 0
        %v1143 = vsel %vm1142, %v1141, 0
        %v1144 = vshrl.u32 %v1143, 5
        %v1145 = vand.u32 %v1143, 31
        %v1146 = vsub.s32 32, %v1145
        %v1147 = vshrl.u32 683565275, %v1146
        %v1148 = vshll.u32 683565275, %v1145
        %v1149 = vshrl.u32 2475754826, %v1146
        %v1150 = vor.u32 %v1148, %v1149
        %v1151 = vshll.u32 2475754826, %v1145
        %v1152 = vshrl.u32 2131351028, %v1146
        %v1153 = vor.u32 %v1151, %v1152
        %v1154 = vshll.u32 2131351028, %v1145
        %v1155 = vshrl.u32 2102212464, %v1146
        %v1156 = vor.u32 %v1154, %v1155
        %v1157 = vshll.u32 2102212464, %v1145
        %v1158 = vshrl.u32 920167782, %v1146
        %v1159 = vor.u32 %v1157, %v1158
        %v1160 = vshll.u32 920167782, %v1145
        %v1161 = vshrl.u32 1326507024, %v1146
        %v1162 = vor.u32 %v1160, %v1161
        %vm1163 = vcmp.lt.s32.totalorder %v1144, 1
        %vm1164 = vcmp.lt.s32.totalorder %v1144, 2
        %vm1165 = vcmp.lt.s32.totalorder %v1144, 3
        %vm1166 = vcmp.lt.s32.totalorder %v1144, 4
        %v1167 = vsel %vm1163, %v1147, %v1150
        %v1168 = vsel %vm1166, %v1156, 2102212464
        %v1169 = vsel %vm1165, %v1153, %v1168
        %v1170 = vsel %vm1164, %v1167, %v1169
        %v1171 = vsel %vm1163, %v1150, %v1153
        %v1172 = vsel %vm1166, %v1159, 920167782
        %v1173 = vsel %vm1165, %v1156, %v1172
        %v1174 = vsel %vm1164, %v1171, %v1173
        %v1175 = vsel %vm1163, %v1153, %v1156
        %v1176 = vsel %vm1166, %v1162, 1326507024
        %v1177 = vsel %vm1165, %v1159, %v1176
        %v1178 = vsel %vm1164, %v1175, %v1177
        %v1179 = vshll.u32 %v1139, 8
        %v1180 = vmul.u32.u64.compose %v1179, %v1178
        %v1181 = vextract.low.u32 %v1180
        %v1182 = vextract.high.u32 %v1180
        %v1183 = vmul.u32.u64.compose %v1179, %v1174
        %v1184 = vextract.low.u32 %v1183
        %v1185 = vextract.high.u32 %v1183
        %v1186 = vmul.u32 %v1179, %v1170
        %v1187 = vadd.s32 %v1182, %v1184
        %vm1188 = vc.u32 %v1182, %v1184
        %v1189 = vadd.s32 %v1185, 1
        %v1190 = vsel %vm1188, %v1189, %v1185
        %v1191 = vadd.s32 %v1186, %v1190
        %v1192 = vadd.s32 %v1191, 536870912
        %v1193 = vshrl.u32 %v1192, 30
        %v1194 = vshll.u32 %v1193, 30
        %v1195 = vsub.s32 %v1191, %v1194
        %vm1196 = vcmp.lt.s32.totalorder %v1195, 0
        %v1197 = vsub.s32 0, %v1195
        %v1198 = vsel %vm1196, %v1197, %v1195
        %v1199 = vclz %v1198
        %v1200 = vsub.s32 %v1199, 2
        %vm1201 = vcmp.gt.s32.totalorder 0, %v1200
        %v1202 = vsel %vm1201, 0, %v1200
        %v1203 = vsub.s32 32, %v1202
        %v1204 = vshll.u32 %v1195, %v1202
        %v1205 = vshrl.u32 %v1187, %v1203
        %v1206 = vor.u32 %v1204, %v1205
        %v1207 = vsub.s32 4294967266, %v1202
        %v1208 = vadd.s32 %v1207, 127
        %v1209 = vshll.u32 %v1208, 23
        %v1210 = vor.u32 4788187, %v1209
        %v1211 = vand.u32 2147483647, %v1210
        %v1213 = vcvt.s32.f32 %v1206
        %v1214 = vmul.f32 %v1213, %v1211
        %v1215 = vxor.u32 %v1214, 2147483648
        %v1216 = vsel %vm1133, %v1215, %v1214
        %v1217 = vsub.s32 4, %v1193
        %v1218 = vsel %vm1133, %v1217, %v1193
        %v1219 = vsel %vm1132, %v400, %v1216
        %v1220 = vsel %vm1132, 0, %v1218
        %v1221 = vcosq.f32.pop %v1219
        %v1222 = vsinq.f32.pop %v1219
        %vm1223 = vweird.f32 %v400
        %v1224 = vadd.s32 %v1220, 3
        %v1225 = vand.u32 %v1224, 3
        %vm1226 = vcmp.lt.s32.totalorder %v1225, 2
        %vm1227 = vcmp.eq.s32.totalorder %v1225, 0
        %v1228 = vxor.u32 %v1222, 2147483648
        %v1229 = vsel %vm1227, %v1221, %v1228
        %vm1230 = vcmp.eq.s32.totalorder %v1225, 2
        %v1231 = vxor.u32 %v1221, 2147483648
        %v1232 = vsel %vm1230, %v1231, %v1222
        %v1233 = vsel %vm1226, %v1229, %v1232
        %v1234 = vsel %vm1223, nan, %v1233
        %v1235 = vand.u32 2147483647, %v401
        %vm1236 = vcmp.le.f32.partialorder %v1235, 0.7853982
        %vm1237 = vcmp.lt.s32.totalorder %v401, 0
        %v1238 = vand.u32 %v401, 2139095040
        %v1239 = vshrl.u32 %v1238, 23
        %v1240 = vsub.s32 %v1239, 127
        %v1241 = vand.u32 2147483647, %v401
        %v1242 = vand.u32 %v1241, 8388607
        %v1243 = vor.u32 %v1242, 8388608
        %v1244 = vsub.s32 0, %v1243
        %v1245 = vadd.s32 %v1240, 1
        %vm1246 = vcmp.gt.s32.totalorder %v1245, 0
        %v1247 = vsel %vm1246, %v1245, 0
        %v1248 = vshrl.u32 %v1247, 5
        %v1249 = vand.u32 %v1247, 31
        %v1250 = vsub.s32 32, %v1249
        %v1251 = vshrl.u32 683565275, %v1250
        %v1252 = vshll.u32 683565275, %v1249
        %v1253 = vshrl.u32 2475754826, %v1250
        %v1254 = vor.u32 %v1252, %v1253
        %v1255 = vshll.u32 2475754826, %v1249
        %v1256 = vshrl.u32 2131351028, %v1250
        %v1257 = vor.u32 %v1255, %v1256
        %v1258 = vshll.u32 2131351028, %v1249
        %v1259 = vshrl.u32 2102212464, %v1250
        %v1260 = vor.u32 %v1258, %v1259
        %v1261 = vshll.u32 2102212464, %v1249
        %v1262 = vshrl.u32 920167782, %v1250
        %v1263 = vor.u32 %v1261, %v1262
        %v1264 = vshll.u32 920167782, %v1249
        %v1265 = vshrl.u32 1326507024, %v1250
        %v1266 = vor.u32 %v1264, %v1265
        %vm1267 = vcmp.lt.s32.totalorder %v1248, 1
        %vm1268 = vcmp.lt.s32.totalorder %v1248, 2
        %vm1269 = vcmp.lt.s32.totalorder %v1248, 3
        %vm1270 = vcmp.lt.s32.totalorder %v1248, 4
        %v1271 = vsel %vm1267, %v1251, %v1254
        %v1272 = vsel %vm1270, %v1260, 2102212464
        %v1273 = vsel %vm1269, %v1257, %v1272
        %v1274 = vsel %vm1268, %v1271, %v1273
        %v1275 = vsel %vm1267, %v1254, %v1257
        %v1276 = vsel %vm1270, %v1263, 920167782
        %v1277 = vsel %vm1269, %v1260, %v1276
        %v1278 = vsel %vm1268, %v1275, %v1277
        %v1279 = vsel %vm1267, %v1257, %v1260
        %v1280 = vsel %vm1270, %v1266, 1326507024
        %v1281 = vsel %vm1269, %v1263, %v1280
        %v1282 = vsel %vm1268, %v1279, %v1281
        %v1283 = vshll.u32 %v1243, 8
        %v1284 = vmul.u32.u64.compose %v1283, %v1282
        %v1285 = vextract.low.u32 %v1284
        %v1286 = vextract.high.u32 %v1284
        %v1287 = vmul.u32.u64.compose %v1283, %v1278
        %v1288 = vextract.low.u32 %v1287
        %v1289 = vextract.high.u32 %v1287
        %v1290 = vmul.u32 %v1283, %v1274
        %v1291 = vadd.s32 %v1286, %v1288
        %vm1292 = vc.u32 %v1286, %v1288
        %v1293 = vadd.s32 %v1289, 1
        %v1294 = vsel %vm1292, %v1293, %v1289
        %v1295 = vadd.s32 %v1290, %v1294
        %v1296 = vadd.s32 %v1295, 536870912
        %v1297 = vshrl.u32 %v1296, 30
        %v1298 = vshll.u32 %v1297, 30
        %v1299 = vsub.s32 %v1295, %v1298
        %vm1300 = vcmp.lt.s32.totalorder %v1299, 0
        %v1301 = vsub.s32 0, %v1299
        %v1302 = vsel %vm1300, %v1301, %v1299
        %v1303 = vclz %v1302
        %v1304 = vsub.s32 %v1303, 2
        %vm1305 = vcmp.gt.s32.totalorder 0, %v1304
        %v1306 = vsel %vm1305, 0, %v1304
        %v1307 = vsub.s32 32, %v1306
        %v1308 = vshll.u32 %v1299, %v1306
        %v1309 = vshrl.u32 %v1291, %v1307
        %v1310 = vor.u32 %v1308, %v1309
        %v1311 = vsub.s32 4294967266, %v1306
        %v1312 = vadd.s32 %v1311, 127
        %v1313 = vshll.u32 %v1312, 23
        %v1314 = vor.u32 4788187, %v1313
        %v1315 = vand.u32 2147483647, %v1314
        %v1317 = vcvt.s32.f32 %v1310
        %v1318 = vmul.f32 %v1317, %v1315
        %v1319 = vxor.u32 %v1318, 2147483648
        %v1320 = vsel %vm1237, %v1319, %v1318
        %v1321 = vsub.s32 4, %v1297
        %v1322 = vsel %vm1237, %v1321, %v1297
        %v1323 = vsel %vm1236, %v401, %v1320
        %v1324 = vsel %vm1236, 0, %v1322
        %v1325 = vcosq.f32.pop %v1323
        %v1326 = vsinq.f32.pop %v1323
        %vm1327 = vweird.f32 %v401
        %v1328 = vadd.s32 %v1324, 3
        %v1329 = vand.u32 %v1328, 3
        %vm1330 = vcmp.lt.s32.totalorder %v1329, 2
        %vm1331 = vcmp.eq.s32.totalorder %v1329, 0
        %v1332 = vxor.u32 %v1326, 2147483648
        %v1333 = vsel %vm1331, %v1325, %v1332
        %vm1334 = vcmp.eq.s32.totalorder %v1329, 2
        %v1335 = vxor.u32 %v1325, 2147483648
        %v1336 = vsel %vm1334, %v1335, %v1326
        %v1337 = vsel %vm1330, %v1333, %v1336
        %v1338 = vsel %vm1327, nan, %v1337
        %v1339 = vand.u32 2147483647, %v402
        %vm1340 = vcmp.le.f32.partialorder %v1339, 0.7853982
        %vm1341 = vcmp.lt.s32.totalorder %v402, 0
        %v1342 = vand.u32 %v402, 2139095040
        %v1343 = vshrl.u32 %v1342, 23
        %v1344 = vsub.s32 %v1343, 127
        %v1345 = vand.u32 2147483647, %v402
        %v1346 = vand.u32 %v1345, 8388607
        %v1347 = vor.u32 %v1346, 8388608
        %v1348 = vsub.s32 0, %v1347
        %v1349 = vadd.s32 %v1344, 1
        %vm1350 = vcmp.gt.s32.totalorder %v1349, 0
        %v1351 = vsel %vm1350, %v1349, 0
        %v1352 = vshrl.u32 %v1351, 5
        %v1353 = vand.u32 %v1351, 31
        %v1354 = vsub.s32 32, %v1353
        %v1355 = vshrl.u32 683565275, %v1354
        %v1356 = vshll.u32 683565275, %v1353
        %v1357 = vshrl.u32 2475754826, %v1354
        %v1358 = vor.u32 %v1356, %v1357
        %v1359 = vshll.u32 2475754826, %v1353
        %v1360 = vshrl.u32 2131351028, %v1354
        %v1361 = vor.u32 %v1359, %v1360
        %v1362 = vshll.u32 2131351028, %v1353
        %v1363 = vshrl.u32 2102212464, %v1354
        %v1364 = vor.u32 %v1362, %v1363
        %v1365 = vshll.u32 2102212464, %v1353
        %v1366 = vshrl.u32 920167782, %v1354
        %v1367 = vor.u32 %v1365, %v1366
        %v1368 = vshll.u32 920167782, %v1353
        %v1369 = vshrl.u32 1326507024, %v1354
        %v1370 = vor.u32 %v1368, %v1369
        %vm1371 = vcmp.lt.s32.totalorder %v1352, 1
        %vm1372 = vcmp.lt.s32.totalorder %v1352, 2
        %vm1373 = vcmp.lt.s32.totalorder %v1352, 3
        %vm1374 = vcmp.lt.s32.totalorder %v1352, 4
        %v1375 = vsel %vm1371, %v1355, %v1358
        %v1376 = vsel %vm1374, %v1364, 2102212464
        %v1377 = vsel %vm1373, %v1361, %v1376
        %v1378 = vsel %vm1372, %v1375, %v1377
        %v1379 = vsel %vm1371, %v1358, %v1361
        %v1380 = vsel %vm1374, %v1367, 920167782
        %v1381 = vsel %vm1373, %v1364, %v1380
        %v1382 = vsel %vm1372, %v1379, %v1381
        %v1383 = vsel %vm1371, %v1361, %v1364
        %v1384 = vsel %vm1374, %v1370, 1326507024
        %v1385 = vsel %vm1373, %v1367, %v1384
        %v1386 = vsel %vm1372, %v1383, %v1385
        %v1387 = vshll.u32 %v1347, 8
        %v1388 = vmul.u32.u64.compose %v1387, %v1386
        %v1389 = vextract.low.u32 %v1388
        %v1390 = vextract.high.u32 %v1388
        %v1391 = vmul.u32.u64.compose %v1387, %v1382
        %v1392 = vextract.low.u32 %v1391
        %v1393 = vextract.high.u32 %v1391
        %v1394 = vmul.u32 %v1387, %v1378
        %v1395 = vadd.s32 %v1390, %v1392
        %vm1396 = vc.u32 %v1390, %v1392
        %v1397 = vadd.s32 %v1393, 1
        %v1398 = vsel %vm1396, %v1397, %v1393
        %v1399 = vadd.s32 %v1394, %v1398
        %v1400 = vadd.s32 %v1399, 536870912
        %v1401 = vshrl.u32 %v1400, 30
        %v1402 = vshll.u32 %v1401, 30
        %v1403 = vsub.s32 %v1399, %v1402
        %vm1404 = vcmp.lt.s32.totalorder %v1403, 0
        %v1405 = vsub.s32 0, %v1403
        %v1406 = vsel %vm1404, %v1405, %v1403
        %v1407 = vclz %v1406
        %v1408 = vsub.s32 %v1407, 2
        %vm1409 = vcmp.gt.s32.totalorder 0, %v1408
        %v1410 = vsel %vm1409, 0, %v1408
        %v1411 = vsub.s32 32, %v1410
        %v1412 = vshll.u32 %v1403, %v1410
        %v1413 = vshrl.u32 %v1395, %v1411
        %v1414 = vor.u32 %v1412, %v1413
        %v1415 = vsub.s32 4294967266, %v1410
        %v1416 = vadd.s32 %v1415, 127
        %v1417 = vshll.u32 %v1416, 23
        %v1418 = vor.u32 4788187, %v1417
        %v1419 = vand.u32 2147483647, %v1418
        %v1421 = vcvt.s32.f32 %v1414
        %v1422 = vmul.f32 %v1421, %v1419
        %v1423 = vxor.u32 %v1422, 2147483648
        %v1424 = vsel %vm1341, %v1423, %v1422
        %v1425 = vsub.s32 4, %v1401
        %v1426 = vsel %vm1341, %v1425, %v1401
        %v1427 = vsel %vm1340, %v402, %v1424
        %v1428 = vsel %vm1340, 0, %v1426
        %v1429 = vcosq.f32.pop %v1427
        %v1430 = vsinq.f32.pop %v1427
        %vm1431 = vweird.f32 %v402
        %v1432 = vadd.s32 %v1428, 3
        %v1433 = vand.u32 %v1432, 3
        %vm1434 = vcmp.lt.s32.totalorder %v1433, 2
        %vm1435 = vcmp.eq.s32.totalorder %v1433, 0
        %v1436 = vxor.u32 %v1430, 2147483648
        %v1437 = vsel %vm1435, %v1429, %v1436
        %vm1438 = vcmp.eq.s32.totalorder %v1433, 2
        %v1439 = vxor.u32 %v1429, 2147483648
        %v1440 = vsel %vm1438, %v1439, %v1430
        %v1441 = vsel %vm1434, %v1437, %v1440
        %v1442 = vsel %vm1431, nan, %v1441
        %1443 = vst [vmem:[%s176] sm:$0xff] %v506
        %1444 = vst [vmem:[%s176 + $0x8] sm:$0xff] %v610
        %1445 = vst [vmem:[%s176 + $0x10] sm:$0xff] %v714
        %1446 = vst [vmem:[%s176 + $0x18] sm:$0xff] %v818
        %1447 = vst [vmem:[%s176 + $0x20] sm:$0xff] %v922
        %1448 = vst [vmem:[%s176 + $0x28] sm:$0xff] %v1026
        %1449 = vst [vmem:[%s176 + $0x30] sm:$0xff] %v1130
        %1450 = vst [vmem:[%s176 + $0x38] sm:$0xff] %v1234
        %1451 = vst [vmem:[%s176 + $0x40] sm:$0xff] %v1338
        %1452 = vst [vmem:[%s176 + $0x48] sm:$0xff] %v1442
        %s1453 = sand.u32 %s93, 1
        %s1454 = scalar_lea.sflag [#allocation3], %s1453
        %s1455 = sand.u32 %s93, 1
        %s1456 = smul.addr %s1455, 80
        %s1457 = scalar_lea.vmem [#allocation2], %s1456
        // Predicated region
        $region33: #{tpu_custom_call.1} parent=31 // pred_check
          %p1458 = pneg %p103
        $region34: #{tpu_custom_call.1} parent=31 // pred_check_branch
          %1460 = sbr.rel (%p1458) target = $region36
        $region35: #{tpu_custom_call.1} parent=31 // pred_region
          %s1461 = smul.u32 10, %s17
          %s1462 = ssub.s32 38, %s1461
          %p1463 = scmp.lt.s32.totalorder %s1462, 10
          %s1464 = scalar_select %p1463, %s1462, 10
          %s1465 = smul.u32 128, %s1464
          %s1467 = ssub.s32 1280, %s1465
          %1468 = vsyncadd %s1454, %s1467
          %p1469 = scmp.ne.s32.totalorder 0, %s1465
          %s1470 = smul.addr %s1461, 128
          %s1471 = scalar_lea.hbm %s3, %s1470
          %s1472 = smul.u32 8, %s1464
          %s1473 = sshll.u32 %s1457, 4
          %s1474 = int_to_ptr.vmem [resolvable:$true] %s1473
          %s1475 = sshll.u32 %s1472, 4
          %1479 = dma.vmem_to_hbm [thread:$0]  (%p1469), %s1474, %s1475, %s1471, %s1454, 128, 128, 8
        $region36: #{tpu_custom_call.1} parent=31 // pred_fallthru
          _
      $region32: #{tpu_custom_call.1} parent=5 // pred_fallthru
        _
      %p1480 = scmp.le.s32.totalorder 2, %s12
      // Predicated region
      $region37: #{tpu_custom_call.1} parent=5 // pred_check
        %p1481 = pneg %p1480
      $region38: #{tpu_custom_call.1} parent=5 // pred_check_branch
        %1483 = sbr.rel (%p1481) target = $region40
      $region39: #{tpu_custom_call.1} parent=5 // pred_region
        %s1484 = ssub.s32 %s12, 2
        // Predicated region
        $region41: #{tpu_custom_call.1} parent=39 // pred_check
          %p1485 = pneg %p109
        $region42: #{tpu_custom_call.1} parent=39 // pred_check_branch
          %1487 = sbr.rel (%p1485) target = $region44
        $region43: #{tpu_custom_call.1} parent=39 // pred_region
          %s1488 = sand.u32 %s94, 1
          %s1489 = scalar_lea.sflag [#allocation3], %s1488
          %s1490 = sand.u32 %s94, 1
          %s1491 = smul.addr %s1490, 80
          %s1492 = scalar_lea.vmem [#allocation2], %s1491
          %1493 = dma.done %s1489, 1280
        $region44: #{tpu_custom_call.1} parent=39 // pred_fallthru
          _
      $region40: #{tpu_custom_call.1} parent=5 // pred_fallthru
        _
    $region6: #{tpu_custom_call.1} parent=1 // loop_footer
      %s16 = sadd.s32 1, %s12
    $region7: #{tpu_custom_call.1} parent=1 // loop_footer_branch
      %11 = sbr.rel target = $region3
    $region8: #{tpu_custom_call.1} parent=1 // loop_exit
      _
    %1494 = vsyncpa [#allocation3], 1
    %s1495 = scalar_lea.sflag [#allocation3], 1
    %1496 = vsyncpa %s1495, 1

</llo_original>
